<compile_context>
chip_gen: v7x
topology: tpu7x:2x2x1
jax: 0.10.0
libtpu: 0.0.40
codegen_flags: <defaults>
</compile_context>

<pallas_src>
import functools

import jax
import jax.numpy as jnp
from jax.experimental import pallas as pl
from jax.experimental.pallas import tpu as pltpu


def _round_up(n, m):
    return ((n + m - 1) // m) * m


def mlp_kernel(x_ref, w1_ref, b1_ref, w2_ref, b2_ref, w3_ref, b3_ref, o_ref):
    x = x_ref[...]                                                       # (TB, 13)

    # Layer 1: Linear(13 -> 26) + ReLU.
    # Contract x's feature axis against W1's input axis: (26,13) x (TB,13) -> (26,TB).
    # From here on activations are feature-major, so batch sits on the lane axis.
    h1 = jax.lax.dot_general(
        w1_ref[...], x,
        dimension_numbers=(((1,), (1,)), ((), ())),
        preferred_element_type=jnp.float32,
        precision=jax.lax.Precision.HIGHEST,
    ) + b1_ref[...]
    h1 = jnp.maximum(h1, 0.0)                                            # (26, TB)

    # Layer 2: Linear(26 -> 13) + Sigmoid.
    h2 = jnp.dot(w2_ref[...], h1, preferred_element_type=jnp.float32,
                 precision=jax.lax.Precision.HIGHEST) + b2_ref[...]
    h2 = jax.nn.sigmoid(h2)                                              # (13, TB)

    # Layer 3: Linear(13 -> 1) + ReLU.
    h3 = jnp.dot(w3_ref[...], h2, preferred_element_type=jnp.float32,
                 precision=jax.lax.Precision.HIGHEST) + b3_ref[...]
    o_ref[...] = jnp.maximum(h3, 0.0)                                    # (1, TB)


@functools.partial(jax.jit, static_argnames=("tile_b",))
def net_forward(x, params, *, tile_b=8192):
    """x: (B, insz) float32 row-vectors (PyTorch convention). Returns (B, 1)."""
    B, F = x.shape
    w1, b1 = params["w1"], params["b1"]    # (26, 13), (26, 1)
    w2, b2 = params["w2"], params["b2"]    # (13, 26), (13, 1)
    w3, b3 = params["w3"], params["b3"]    # (1, 13),  (1, 1)

    # Batch tile: multiple of 128 lanes, large by default, but capped at
    # ceil(B/2) (rounded up to 128) so the grid has >=2 steps whenever B allows
    # it -> v7x megacore actually shards the batch.  No padding of x / out:
    # the last block's OOB lanes are clipped on store.
    tile_b = _round_up(tile_b, 128)
    tb = min(tile_b, _round_up(pl.cdiv(B, 2), 128))
    grid = (pl.cdiv(B, tb),)

    param_bytes = 4 * sum(int(a.size) for a in (w1, b1, w2, b2, w3, b3))
    cost = pl.CostEstimate(
        flops=2 * B * (F * 26 + 26 * 13 + 13 * 1),
        transcendentals=13 * B,                      # sigmoid
        bytes_accessed=B * F * 4 + B * 4 + param_bytes,
    )

    out_fm = pl.pallas_call(
        mlp_kernel,
        out_shape=jax.ShapeDtypeStruct((1, B), jnp.float32),
        grid=grid,
        in_specs=[
            pl.BlockSpec((tb, F), lambda i: (i, 0)),      # natural-layout x tile
            pl.BlockSpec(w1.shape, lambda i: (0, 0)),     # params stay resident
            pl.BlockSpec(b1.shape, lambda i: (0, 0)),
            pl.BlockSpec(w2.shape, lambda i: (0, 0)),
            pl.BlockSpec(b2.shape, lambda i: (0, 0)),
            pl.BlockSpec(w3.shape, lambda i: (0, 0)),
            pl.BlockSpec(b3.shape, lambda i: (0, 0)),
        ],
        out_specs=pl.BlockSpec((1, tb), lambda i: (0, i)),  # lane-dense output
        compiler_params=pltpu.CompilerParams(
            dimension_semantics=("parallel",),              # megacore on v7x
            vmem_limit_bytes=32 * 1024 * 1024,
        ),
        cost_estimate=cost,
    )(x.astype(jnp.float32), w1, b1, w2, b2, w3, b3)

    return out_fm[0].reshape(B, 1)


def init_params(key, insz=13):
    """Deterministic init mirroring nn.Linear: weights (out, in), biases (out, 1)."""
    k1, k2, k3, k4, k5, k6 = jax.random.split(key, 6)

    def uniform(k, shape, fan_in):
        bound = 1.0 / jnp.sqrt(float(fan_in))
        return jax.random.uniform(k, shape, jnp.float32, -bound, bound)

    return {
        # l13: Linear(insz, 26)
        "w1": uniform(k1, (26, insz), insz),
        "b1": uniform(k2, (26, 1), insz),
        # lh5: Linear(26, 13)
        "w2": uniform(k3, (13, 26), 26),
        "b2": uniform(k4, (13, 1), 26),
        # lh2: Linear(13, 1)
        "w3": uniform(k5, (1, 13), 13),
        "b3": uniform(k6, (1, 1), 13),
    }


def reference_forward(x, p):
    hp = jax.lax.Precision.HIGHEST
    h1 = jnp.maximum(jnp.dot(x, p["w1"].T, precision=hp) + p["b1"].T, 0.0)
    h2 = jax.nn.sigmoid(jnp.dot(h1, p["w2"].T, precision=hp) + p["b2"].T)
    return jnp.maximum(jnp.dot(h2, p["w3"].T, precision=hp) + p["b3"].T, 0.0)


if __name__ == "__main__":
    key = jax.random.PRNGKey(0)
    k_params, k_x1, k_x2 = jax.random.split(key, 3)

    insz = 13
    params = init_params(k_params, insz=insz)

    # Small batch: single grid step, tile shrinks to 128 lanes, clipped store.
    x_small = jax.random.normal(k_x1, (8, insz), dtype=jnp.float32)
    out_small = jax.block_until_ready(net_forward(x_small, params))
    ref_small = reference_forward(x_small, params)
    assert out_small.shape == (8, 1)
    assert jnp.allclose(out_small, ref_small, atol=1e-5, rtol=1e-5)

    # Larger, non-multiple batch: 2 grid steps (tb=1280), OOB tail clipped.
    x_big = jax.random.normal(k_x2, (2500, insz), dtype=jnp.float32)
    out_big = jax.block_until_ready(net_forward(x_big, params))
    ref_big = reference_forward(x_big, params)
    assert out_big.shape == (2500, 1)
    assert jnp.allclose(out_big, ref_big, atol=1e-5, rtol=1e-5)

    print("KERNEL_OK")
</pallas_src>

<mosaic_0001>
module attributes {stable_mosaic.version = 11 : i64} {
  func.func @mlp_kernel(%arg0: i32, %arg1: memref<128x13xf32, #tpu.memory_space<vmem>>, %arg2: memref<26x13xf32, #tpu.memory_space<vmem>>, %arg3: memref<26x1xf32, #tpu.memory_space<vmem>>, %arg4: memref<13x26xf32, #tpu.memory_space<vmem>>, %arg5: memref<13x1xf32, #tpu.memory_space<vmem>>, %arg6: memref<1x13xf32, #tpu.memory_space<vmem>>, %arg7: memref<1x1xf32, #tpu.memory_space<vmem>>, %arg8: memref<1x128xf32, #tpu.memory_space<vmem>>) attributes {dimension_semantics = [#tpu.dimension_semantics<parallel>], iteration_bounds = array<i64: 1>, scalar_prefetch = 0 : i64, scratch_operands = 0 : i64, tpu.core_type = #tpu.core_type<tc>, window_params = [{transform_indices = @transform_0, window_bounds = array<i64: 128, 13>}, {pipeline_mode = #tpu.pipeline_mode<synchronous>, transform_indices = @transform_1, window_bounds = array<i64: 26, 13>}, {pipeline_mode = #tpu.pipeline_mode<synchronous>, transform_indices = @transform_2, window_bounds = array<i64: 26, 1>}, {pipeline_mode = #tpu.pipeline_mode<synchronous>, transform_indices = @transform_3, window_bounds = array<i64: 13, 26>}, {pipeline_mode = #tpu.pipeline_mode<synchronous>, transform_indices = @transform_4, window_bounds = array<i64: 13, 1>}, {pipeline_mode = #tpu.pipeline_mode<synchronous>, transform_indices = @transform_5, window_bounds = array<i64: 1, 13>}, {pipeline_mode = #tpu.pipeline_mode<synchronous>, transform_indices = @transform_6, window_bounds = array<i64: 1, 1>}, {transform_indices = @transform_7, window_bounds = array<i64: 1, 128>}]} {
    %c0 = arith.constant 0 : index
    %c0_0 = arith.constant 0 : index
    %0 = vector.load %arg1[%c0, %c0_0] : memref<128x13xf32, #tpu.memory_space<vmem>>, vector<128x13xf32>
    %c0_1 = arith.constant 0 : index
    %c0_2 = arith.constant 0 : index
    %1 = vector.load %arg2[%c0_1, %c0_2] : memref<26x13xf32, #tpu.memory_space<vmem>>, vector<26x13xf32>
    %cst = arith.constant dense<0.000000e+00> : vector<26x128xf32>
    %2 = tpu.matmul %1, %0, %cst {dimension_numbers = #tpu.dot_dimension_numbers<[1], [1], [0], [0], [0, 0, 1, 0], [], []>, precision = #tpu.contract_precision<fp32>} : vector<26x13xf32>, vector<128x13xf32>, vector<26x128xf32> -> vector<26x128xf32>
    %c0_3 = arith.constant 0 : index
    %c0_4 = arith.constant 0 : index
    %3 = vector.load %arg3[%c0_3, %c0_4] : memref<26x1xf32, #tpu.memory_space<vmem>>, vector<26x1xf32>
    %4 = vector.broadcast %3 : vector<26x1xf32> to vector<26x128xf32>
    %5 = arith.addf %2, %4 : vector<26x128xf32>
    %cst_5 = arith.constant 0.000000e+00 : f32
    %6 = vector.broadcast %cst_5 : f32 to vector<26x128xf32>
    %7 = arith.maximumf %5, %6 : vector<26x128xf32>
    %c0_6 = arith.constant 0 : index
    %c0_7 = arith.constant 0 : index
    %8 = vector.load %arg4[%c0_6, %c0_7] : memref<13x26xf32, #tpu.memory_space<vmem>>, vector<13x26xf32>
    %cst_8 = arith.constant dense<0.000000e+00> : vector<13x128xf32>
    %9 = tpu.matmul %8, %7, %cst_8 {dimension_numbers = #tpu.dot_dimension_numbers<[1], [0], [0], [1], [0, 0, 1, 1], [], []>, precision = #tpu.contract_precision<fp32>} : vector<13x26xf32>, vector<26x128xf32>, vector<13x128xf32> -> vector<13x128xf32>
    %c0_9 = arith.constant 0 : index
    %c0_10 = arith.constant 0 : index
    %10 = vector.load %arg5[%c0_9, %c0_10] : memref<13x1xf32, #tpu.memory_space<vmem>>, vector<13x1xf32>
    %11 = vector.broadcast %10 : vector<13x1xf32> to vector<13x128xf32>
    %12 = arith.addf %9, %11 : vector<13x128xf32>
    %13 = arith.negf %12 : vector<13x128xf32>
    %14 = math.exp %13 : vector<13x128xf32>
    %cst_11 = arith.constant 1.000000e+00 : f32
    %15 = vector.broadcast %cst_11 : f32 to vector<13x128xf32>
    %16 = arith.addf %15, %14 : vector<13x128xf32>
    %17 = arith.divf %15, %16 : vector<13x128xf32>
    %c0_12 = arith.constant 0 : index
    %c0_13 = arith.constant 0 : index
    %18 = vector.load %arg6[%c0_12, %c0_13] : memref<1x13xf32, #tpu.memory_space<vmem>>, vector<1x13xf32>
    %cst_14 = arith.constant dense<0.000000e+00> : vector<1x128xf32>
    %19 = tpu.matmul %18, %17, %cst_14 {dimension_numbers = #tpu.dot_dimension_numbers<[1], [0], [0], [1], [0, 0, 1, 1], [], []>, precision = #tpu.contract_precision<fp32>} : vector<1x13xf32>, vector<13x128xf32>, vector<1x128xf32> -> vector<1x128xf32>
    %c0_15 = arith.constant 0 : index
    %c0_16 = arith.constant 0 : index
    %20 = vector.load %arg7[%c0_15, %c0_16] : memref<1x1xf32, #tpu.memory_space<vmem>>, vector<1x1xf32>
    %21 = vector.broadcast %20 : vector<1x1xf32> to vector<1x128xf32>
    %22 = arith.addf %19, %21 : vector<1x128xf32>
    %cst_17 = arith.constant 0.000000e+00 : f32
    %23 = vector.broadcast %cst_17 : f32 to vector<1x128xf32>
    %24 = arith.maximumf %22, %23 : vector<1x128xf32>
    %c0_18 = arith.constant 0 : index
    %c0_19 = arith.constant 0 : index
    %25 = vector.load %arg8[%c0_18, %c0_19] : memref<1x128xf32, #tpu.memory_space<vmem>>, vector<1x128xf32>
    tpu.vector_store %arg8[%c0_18, %c0_19], %24 {strides = array<i32>} : memref<1x128xf32, #tpu.memory_space<vmem>>, vector<1x128xf32>,
    return
  }
  func.func @transform_0(%arg0: i32) -> (i32, i32) {
    %c0_i32 = arith.constant 0 : i32
    %c0_i32_0 = arith.constant 0 : i32
    return %arg0, %c0_i32 : i32, i32
  }
  func.func @transform_1(%arg0: i32) -> (i32, i32) {
    %c0_i32 = arith.constant 0 : i32
    %c0_i32_0 = arith.constant 0 : i32
    %c0_i32_1 = arith.constant 0 : i32
    return %c0_i32, %c0_i32_0 : i32, i32
  }
  func.func @transform_2(%arg0: i32) -> (i32, i32) {
    %c0_i32 = arith.constant 0 : i32
    %c0_i32_0 = arith.constant 0 : i32
    %c0_i32_1 = arith.constant 0 : i32
    return %c0_i32, %c0_i32_0 : i32, i32
  }
  func.func @transform_3(%arg0: i32) -> (i32, i32) {
    %c0_i32 = arith.constant 0 : i32
    %c0_i32_0 = arith.constant 0 : i32
    %c0_i32_1 = arith.constant 0 : i32
    return %c0_i32, %c0_i32_0 : i32, i32
  }
  func.func @transform_4(%arg0: i32) -> (i32, i32) {
    %c0_i32 = arith.constant 0 : i32
    %c0_i32_0 = arith.constant 0 : i32
    %c0_i32_1 = arith.constant 0 : i32
    return %c0_i32, %c0_i32_0 : i32, i32
  }
  func.func @transform_5(%arg0: i32) -> (i32, i32) {
    %c0_i32 = arith.constant 0 : i32
    %c0_i32_0 = arith.constant 0 : i32
    %c0_i32_1 = arith.constant 0 : i32
    return %c0_i32, %c0_i32_0 : i32, i32
  }
  func.func @transform_6(%arg0: i32) -> (i32, i32) {
    %c0_i32 = arith.constant 0 : i32
    %c0_i32_0 = arith.constant 0 : i32
    %c0_i32_1 = arith.constant 0 : i32
    return %c0_i32, %c0_i32_0 : i32, i32
  }
  func.func @transform_7(%arg0: i32) -> (i32, i32) {
    %c0_i32 = arith.constant 0 : i32
    %c0_i32_0 = arith.constant 0 : i32
    return %c0_i32, %arg0 : i32, i32
  }
}

</mosaic_0001>

<llo_original>
// kernel: net_forward.1
$region0: #{net_forward.1}
  #allocation0 [shape = 'u32[]', space=smem, size = 0x4, offset = 0x4, fixed_abs, tag = 'smem constant byte address 0x4 - core index']
  #allocation1 [shape = 'u32[144,128]{1,0:T(1,128)}', space=vmem, size = 0x12000, scoped, tag = 'internal scratch']
  #allocation2 [shape = 'f32[1,1]{1,0:T(1,128)S(1)}', space=vmem, size = 0x200, scoped, tag = 'scoped memory for net_forward.1']
  %s0 = inlined_call_operand.vmem [shape: f32[8,13], index: 0, kind: input, shape index: {}]
  %s1 = inlined_call_operand.vmem [shape: f32[26,13], index: 1, kind: input, shape index: {}]
  %s2 = inlined_call_operand.vmem [shape: f32[26,1], index: 2, kind: input, shape index: {}]
  %s3 = inlined_call_operand.vmem [shape: f32[13,26], index: 3, kind: input, shape index: {}]
  %s4 = inlined_call_operand.vmem [shape: f32[13,1], index: 4, kind: input, shape index: {}]
  %s5 = inlined_call_operand.vmem [shape: f32[1,13], index: 5, kind: input, shape index: {}]
  %s6 = inlined_call_operand.<no memory space> [shape: f32[1,1], index: 6, kind: input, shape index: {}]
  %s7 = inlined_call_operand.hbm [shape: f32[1,8], index: 7, kind: output, shape index: {}]
  %s8 = sld [smem:[#allocation0]]
  $region38: #{net_forward.1} parent=0
    _
  %s10 = ssub.s32 1, %s8
  %s11 = scalar_select 0, %s10, %s8
  %v12 = vstv %s6
  %13 = vst [vmem:[#allocation2] sm:$0x1] %v12
  $region1: #{net_forward.1} parent=0
    #allocation3 [shape = 'u8[512]{0}', space=vmem, size = 0x400, scoped, tag = 'output window, operand 0, single buffered']
    #allocation4 [shape = 's32[1]{0}', space=sflag, size = 0x4, scoped, tag = 'scoped memory for net_forward.1']
    %14 = vsyncpa [#allocation4], 0
    // Predicated region
    $region2: #{net_forward.1} parent=1 // pred_check
      _
    $region3: #{net_forward.1} parent=1 // pred_check_branch
      %16 = sbr.rel (0) target = $region5
    $region4: #{net_forward.1} parent=1 // pred_region
      _
    $region5: #{net_forward.1} parent=1 // pred_fallthru
      _
    // Predicated region
    $region6: #{net_forward.1} parent=1 // pred_check
      _
    $region7: #{net_forward.1} parent=1 // pred_check_branch
      %18 = sbr.rel (0) target = $region9
    $region8: #{net_forward.1} parent=1 // pred_region
      _
    $region9: #{net_forward.1} parent=1 // pred_fallthru
      _
    // Predicated region
    $region10: #{net_forward.1} parent=1 // pred_check
      _
    $region11: #{net_forward.1} parent=1 // pred_check_branch
      %20 = sbr.rel (0) target = $region13
    $region12: #{net_forward.1} parent=1 // pred_region
      _
    $region13: #{net_forward.1} parent=1 // pred_fallthru
      _
    // Predicated region
    $region14: #{net_forward.1} parent=1 // pred_check
      _
    $region15: #{net_forward.1} parent=1 // pred_check_branch
      %22 = sbr.rel (0) target = $region17
    $region16: #{net_forward.1} parent=1 // pred_region
      _
    $region17: #{net_forward.1} parent=1 // pred_fallthru
      _
    // Predicated region
    $region18: #{net_forward.1} parent=1 // pred_check
      _
    $region19: #{net_forward.1} parent=1 // pred_check_branch
      %24 = sbr.rel (0) target = $region21
    $region20: #{net_forward.1} parent=1 // pred_region
      _
    $region21: #{net_forward.1} parent=1 // pred_fallthru
      _
    // Predicated region
    $region22: #{net_forward.1} parent=1 // pred_check
      _
    $region23: #{net_forward.1} parent=1 // pred_check_branch
      %26 = sbr.rel (0) target = $region25
    $region24: #{net_forward.1} parent=1 // pred_region
      _
    $region25: #{net_forward.1} parent=1 // pred_fallthru
      _
    // Predicated region
    $region26: #{net_forward.1} parent=1 // pred_check
      _
    $region27: #{net_forward.1} parent=1 // pred_check_branch
      %28 = sbr.rel (0) target = $region29
    $region28: #{net_forward.1} parent=1 // pred_region
      _
    $region29: #{net_forward.1} parent=1 // pred_fallthru
      _
    %v29 = vld [vmem:[%s0] sm:$0xff]
    %v30 = vld [vmem:[%s0 + $0x8] sm:$0xff]
    %v31 = vld [vmem:[%s0 + $0x10] sm:$0xff]
    %v32 = vld [vmem:[%s0 + $0x18] sm:$0xff]
    %v33 = vld [vmem:[%s0 + $0x20] sm:$0xff]
    %v34 = vld [vmem:[%s0 + $0x28] sm:$0xff]
    %v35 = vld [vmem:[%s0 + $0x30] sm:$0xff]
    %v36 = vld [vmem:[%s0 + $0x38] sm:$0xff]
    %v37 = vld [vmem:[%s0 + $0x40] sm:$0xff]
    %v38 = vld [vmem:[%s0 + $0x48] sm:$0xff]
    %v39 = vld [vmem:[%s0 + $0x50] sm:$0xff]
    %v40 = vld [vmem:[%s0 + $0x58] sm:$0xff]
    %v41 = vld [vmem:[%s0 + $0x60] sm:$0xff]
    %v42 = vld [vmem:[%s0 + $0x68] sm:$0xff]
    %v43 = vld [vmem:[%s0 + $0x70] sm:$0xff]
    %v44 = vld [vmem:[%s0 + $0x78] sm:$0xff]
    %v45 = vld [vmem:[%s1] sm:$0xff]
    %v46 = vld [vmem:[%s1 + $0x8] sm:$0xff]
    %v47 = vld [vmem:[%s1 + $0x10] sm:$0xff]
    %v48 = vld [vmem:[%s1 + $0x18] sm:$0x3]
    %v49 = vld [vmem:[%s2] sm:$0xff]
    %v50 = vld [vmem:[%s2 + $0x8] sm:$0xff]
    %v51 = vld [vmem:[%s2 + $0x10] sm:$0xff]
    %v52 = vld [vmem:[%s2 + $0x18] sm:$0x3]
    %54 = vset.pattern.permute.xlu0 0
    %55 = vperm.xlu0 %54, %v49
    %v56 = vpop.permute.xlu0 %55
    %59 = vset.pattern.permute.xlu0 0
    %60 = vperm.xlu0 %59, %v50
    %v61 = vpop.permute.xlu0 %60
    %64 = vset.pattern.permute.xlu0 0
    %65 = vperm.xlu0 %64, %v51
    %v66 = vpop.permute.xlu0 %65
    %69 = vset.pattern.permute.xlu0 0
    %70 = vperm.xlu0 %69, %v52
    %v71 = vpop.permute.xlu0 %70
    %vm73 = vcmask 105472
    %v75 = vsel %vm73, %v45, 0
    %v78 = vsel %vm73, %v46, 0
    %v81 = vsel %vm73, %v47, 0
    %v84 = vsel %vm73, %v48, 0
    %v87 = vsel %vm73, %v29, 0
    %v90 = vsel %vm73, %v30, 0
    %v93 = vsel %vm73, %v31, 0
    %v96 = vsel %vm73, %v32, 0
    %v99 = vsel %vm73, %v33, 0
    %v102 = vsel %vm73, %v34, 0
    %v105 = vsel %vm73, %v35, 0
    %v108 = vsel %vm73, %v36, 0
    %v111 = vsel %vm73, %v37, 0
    %v114 = vsel %vm73, %v38, 0
    %v117 = vsel %vm73, %v39, 0
    %v120 = vsel %vm73, %v40, 0
    %v123 = vsel %vm73, %v41, 0
    %v126 = vsel %vm73, %v42, 0
    %v129 = vsel %vm73, %v43, 0
    %v132 = vsel %vm73, %v44, 0
    %134 = vmatprep.subr.mxu0 0.0
    %v135 = vand.u32 %v87, 4294901760
    %136 = vmatpush1.xpose.msra.mxu0 %v135
    %137 = vmatprep.subr.mxu0 0.0
    %v138 = vand.u32 %v90, 4294901760
    %139 = vmatpush1.xpose.msra.mxu0 %v138
    %140 = vmatprep.subr.mxu0 0.0
    %v141 = vand.u32 %v93, 4294901760
    %142 = vmatpush1.xpose.msra.mxu0 %v141
    %143 = vmatprep.subr.mxu0 0.0
    %v144 = vand.u32 %v96, 4294901760
    %145 = vmatpush1.xpose.msra.mxu0 %v144
    %146 = vmatprep.subr.mxu0 0.0
    %v147 = vand.u32 %v99, 4294901760
    %148 = vmatpush1.xpose.msra.mxu0 %v147
    %149 = vmatprep.subr.mxu0 0.0
    %v150 = vand.u32 %v102, 4294901760
    %151 = vmatpush1.xpose.msra.mxu0 %v150
    %152 = vmatprep.subr.mxu0 0.0
    %v153 = vand.u32 %v105, 4294901760
    %154 = vmatpush1.xpose.msra.mxu0 %v153
    %155 = vmatprep.subr.mxu0 0.0
    %v156 = vand.u32 %v108, 4294901760
    %157 = vmatpush1.xpose.msra.mxu0 %v156
    %158 = vmatprep.subr.mxu0 0.0
    %v159 = vand.u32 %v111, 4294901760
    %160 = vmatpush1.xpose.msra.mxu0 %v159
    %161 = vmatprep.subr.mxu0 0.0
    %v162 = vand.u32 %v114, 4294901760
    %163 = vmatpush1.xpose.msra.mxu0 %v162
    %164 = vmatprep.subr.mxu0 0.0
    %v165 = vand.u32 %v117, 4294901760
    %166 = vmatpush1.xpose.msra.mxu0 %v165
    %167 = vmatprep.subr.mxu0 0.0
    %v168 = vand.u32 %v120, 4294901760
    %169 = vmatpush1.xpose.msra.mxu0 %v168
    %170 = vmatprep.subr.mxu0 0.0
    %v171 = vand.u32 %v123, 4294901760
    %172 = vmatpush1.xpose.msra.mxu0 %v171
    %173 = vmatprep.subr.mxu0 0.0
    %v174 = vand.u32 %v126, 4294901760
    %175 = vmatpush1.xpose.msra.mxu0 %v174
    %176 = vmatprep.subr.mxu0 0.0
    %v177 = vand.u32 %v129, 4294901760
    %178 = vmatpush1.xpose.msra.mxu0 %v177
    %179 = vmatprep.subr.mxu0 0.0
    %v180 = vand.u32 %v132, 4294901760
    %181 = vmatpush1.xpose.msra.mxu0 %v180
    %182 = vmatprep.subr.mxu0 0.0
    %183 = vmatpush1.xpose.msra.mxu0 0.0
    %184 = vmatprep.subr.mxu0 0.0
    %185 = vmatpush1.xpose.msra.mxu0 0.0
    %186 = vmatprep.subr.mxu0 0.0
    %187 = vmatpush1.xpose.msra.mxu0 0.0
    %188 = vmatprep.subr.mxu0 0.0
    %189 = vmatpush1.xpose.msra.mxu0 0.0
    %190 = vmatprep.subr.mxu0 0.0
    %191 = vmatpush1.xpose.msra.mxu0 0.0
    %192 = vmatprep.subr.mxu0 0.0
    %193 = vmatpush1.xpose.msra.mxu0 0.0
    %194 = vmatprep.subr.mxu0 0.0
    %195 = vmatpush1.xpose.msra.mxu0 0.0
    %196 = vmatprep.subr.mxu0 0.0
    %197 = vmatpush1.xpose.msra.mxu0 0.0
    %198 = vmatprep.subr.mxu0 0.0
    %199 = vmatpush1.xpose.msra.mxu0 0.0
    %200 = vmatprep.subr.mxu0 0.0
    %201 = vmatpush1.xpose.msra.mxu0 0.0
    %202 = vmatprep.subr.mxu0 0.0
    %203 = vmatpush1.xpose.msra.mxu0 0.0
    %204 = vmatprep.subr.mxu0 0.0
    %205 = vmatpush1.xpose.msra.mxu0 0.0
    %206 = vmatprep.subr.mxu0 0.0
    %207 = vmatpush1.xpose.msra.mxu0 0.0
    %208 = vmatprep.subr.mxu0 0.0
    %209 = vmatpush1.xpose.msra.mxu0 0.0
    %210 = vmatprep.subr.mxu0 0.0
    %211 = vmatpush1.xpose.msra.mxu0 0.0
    %212 = vmatprep.subr.mxu0 0.0
    %213 = vmatpush1.xpose.msra.mxu0 0.0
    %214 = vmatprep.mubr.f32.mxu0 0.0
    %v215 = vand.u32 %v75, 4294901760
    %v216 = vsub.f32 %v75, %v215
    %v217 = vand.u32 %v216, 4294901760
    %v218 = vsub.f32 %v216, %v217
    %v219 = vand.u32 %v218, 4294901760
    %220 = vmatmul.mubr.f32.gmra.mrb[0].mxu0 %v219
    %v221 = vpop.f32.mrb[0].mxu0
    %v222 = vadd.f32 %v56, %v221
    %v223 = vpop.f32.mrb[0].mxu0
    %224 = vmatprep.mubr.f32.mxu0 0.0
    %v225 = vand.u32 %v78, 4294901760
    %v226 = vsub.f32 %v78, %v225
    %v227 = vand.u32 %v226, 4294901760
    %v228 = vsub.f32 %v226, %v227
    %v229 = vand.u32 %v228, 4294901760
    %230 = vmatmul.mubr.f32.gmra.mrb[0].mxu0 %v229
    %v231 = vpop.f32.mrb[0].mxu0
    %v232 = vadd.f32 %v61, %v231
    %v233 = vpop.f32.mrb[0].mxu0
    %234 = vmatprep.mubr.f32.mxu0 0.0
    %v235 = vand.u32 %v81, 4294901760
    %v236 = vsub.f32 %v81, %v235
    %v237 = vand.u32 %v236, 4294901760
    %v238 = vsub.f32 %v236, %v237
    %v239 = vand.u32 %v238, 4294901760
    %240 = vmatmul.mubr.f32.gmra.mrb[0].mxu0 %v239
    %v241 = vpop.f32.mrb[0].mxu0
    %v242 = vadd.f32 %v66, %v241
    %v243 = vpop.f32.mrb[0].mxu0
    %244 = vmatprep.mubr.f32.mxu0 0.0
    %v245 = vand.u32 %v84, 4294901760
    %v246 = vsub.f32 %v84, %v245
    %v247 = vand.u32 %v246, 4294901760
    %v248 = vsub.f32 %v246, %v247
    %v249 = vand.u32 %v248, 4294901760
    %250 = vmatmul.mubr.f32.gmra.mrb[0].mxu0 %v249
    %v251 = vpop.f32.mrb[0].mxu0
    %v252 = vadd.f32 %v71, %v251
    %v253 = vpop.f32.mrb[0].mxu0
    %254 = vdwg.mxu0
    %255 = vmatprep.subr.mxu0 0.0
    %v256 = vand.u32 %v87, 4294901760
    %v257 = vsub.f32 %v87, %v256
    %v258 = vand.u32 %v257, 4294901760
    %v259 = vsub.f32 %v257, %v258
    %v260 = vand.u32 %v259, 4294901760
    %261 = vmatpush1.xpose.msra.mxu0 %v260
    %262 = vmatprep.subr.mxu0 0.0
    %v263 = vand.u32 %v90, 4294901760
    %v264 = vsub.f32 %v90, %v263
    %v265 = vand.u32 %v264, 4294901760
    %v266 = vsub.f32 %v264, %v265
    %v267 = vand.u32 %v266, 4294901760
    %268 = vmatpush1.xpose.msra.mxu0 %v267
    %269 = vmatprep.subr.mxu0 0.0
    %v270 = vand.u32 %v93, 4294901760
    %v271 = vsub.f32 %v93, %v270
    %v272 = vand.u32 %v271, 4294901760
    %v273 = vsub.f32 %v271, %v272
    %v274 = vand.u32 %v273, 4294901760
    %275 = vmatpush1.xpose.msra.mxu0 %v274
    %276 = vmatprep.subr.mxu0 0.0
    %v277 = vand.u32 %v96, 4294901760
    %v278 = vsub.f32 %v96, %v277
    %v279 = vand.u32 %v278, 4294901760
    %v280 = vsub.f32 %v278, %v279
    %v281 = vand.u32 %v280, 4294901760
    %282 = vmatpush1.xpose.msra.mxu0 %v281
    %283 = vmatprep.subr.mxu0 0.0
    %v284 = vand.u32 %v99, 4294901760
    %v285 = vsub.f32 %v99, %v284
    %v286 = vand.u32 %v285, 4294901760
    %v287 = vsub.f32 %v285, %v286
    %v288 = vand.u32 %v287, 4294901760
    %289 = vmatpush1.xpose.msra.mxu0 %v288
    %290 = vmatprep.subr.mxu0 0.0
    %v291 = vand.u32 %v102, 4294901760
    %v292 = vsub.f32 %v102, %v291
    %v293 = vand.u32 %v292, 4294901760
    %v294 = vsub.f32 %v292, %v293
    %v295 = vand.u32 %v294, 4294901760
    %296 = vmatpush1.xpose.msra.mxu0 %v295
    %297 = vmatprep.subr.mxu0 0.0
    %v298 = vand.u32 %v105, 4294901760
    %v299 = vsub.f32 %v105, %v298
    %v300 = vand.u32 %v299, 4294901760
    %v301 = vsub.f32 %v299, %v300
    %v302 = vand.u32 %v301, 4294901760
    %303 = vmatpush1.xpose.msra.mxu0 %v302
    %304 = vmatprep.subr.mxu0 0.0
    %v305 = vand.u32 %v108, 4294901760
    %v306 = vsub.f32 %v108, %v305
    %v307 = vand.u32 %v306, 4294901760
    %v308 = vsub.f32 %v306, %v307
    %v309 = vand.u32 %v308, 4294901760
    %310 = vmatpush1.xpose.msra.mxu0 %v309
    %311 = vmatprep.subr.mxu0 0.0
    %v312 = vand.u32 %v111, 4294901760
    %v313 = vsub.f32 %v111, %v312
    %v314 = vand.u32 %v313, 4294901760
    %v315 = vsub.f32 %v313, %v314
    %v316 = vand.u32 %v315, 4294901760
    %317 = vmatpush1.xpose.msra.mxu0 %v316
    %318 = vmatprep.subr.mxu0 0.0
    %v319 = vand.u32 %v114, 4294901760
    %v320 = vsub.f32 %v114, %v319
    %v321 = vand.u32 %v320, 4294901760
    %v322 = vsub.f32 %v320, %v321
    %v323 = vand.u32 %v322, 4294901760
    %324 = vmatpush1.xpose.msra.mxu0 %v323
    %325 = vmatprep.subr.mxu0 0.0
    %v326 = vand.u32 %v117, 4294901760
    %v327 = vsub.f32 %v117, %v326
    %v328 = vand.u32 %v327, 4294901760
    %v329 = vsub.f32 %v327, %v328
    %v330 = vand.u32 %v329, 4294901760
    %331 = vmatpush1.xpose.msra.mxu0 %v330
    %332 = vmatprep.subr.mxu0 0.0
    %v333 = vand.u32 %v120, 4294901760
    %v334 = vsub.f32 %v120, %v333
    %v335 = vand.u32 %v334, 4294901760
    %v336 = vsub.f32 %v334, %v335
    %v337 = vand.u32 %v336, 4294901760
    %338 = vmatpush1.xpose.msra.mxu0 %v337
    %339 = vmatprep.subr.mxu0 0.0
    %v340 = vand.u32 %v123, 4294901760
    %v341 = vsub.f32 %v123, %v340
    %v342 = vand.u32 %v341, 4294901760
    %v343 = vsub.f32 %v341, %v342
    %v344 = vand.u32 %v343, 4294901760
    %345 = vmatpush1.xpose.msra.mxu0 %v344
    %346 = vmatprep.subr.mxu0 0.0
    %v347 = vand.u32 %v126, 4294901760
    %v348 = vsub.f32 %v126, %v347
    %v349 = vand.u32 %v348, 4294901760
    %v350 = vsub.f32 %v348, %v349
    %v351 = vand.u32 %v350, 4294901760
    %352 = vmatpush1.xpose.msra.mxu0 %v351
    %353 = vmatprep.subr.mxu0 0.0
    %v354 = vand.u32 %v129, 4294901760
    %v355 = vsub.f32 %v129, %v354
    %v356 = vand.u32 %v355, 4294901760
    %v357 = vsub.f32 %v355, %v356
    %v358 = vand.u32 %v357, 4294901760
    %359 = vmatpush1.xpose.msra.mxu0 %v358
    %360 = vmatprep.subr.mxu0 0.0
    %v361 = vand.u32 %v132, 4294901760
    %v362 = vsub.f32 %v132, %v361
    %v363 = vand.u32 %v362, 4294901760
    %v364 = vsub.f32 %v362, %v363
    %v365 = vand.u32 %v364, 4294901760
    %366 = vmatpush1.xpose.msra.mxu0 %v365
    %367 = vmatprep.subr.mxu0 0.0
    %368 = vmatpush1.xpose.msra.mxu0 0.0
    %369 = vmatprep.subr.mxu0 0.0
    %370 = vmatpush1.xpose.msra.mxu0 0.0
    %371 = vmatprep.subr.mxu0 0.0
    %372 = vmatpush1.xpose.msra.mxu0 0.0
    %373 = vmatprep.subr.mxu0 0.0
    %374 = vmatpush1.xpose.msra.mxu0 0.0
    %375 = vmatprep.subr.mxu0 0.0
    %376 = vmatpush1.xpose.msra.mxu0 0.0
    %377 = vmatprep.subr.mxu0 0.0
    %378 = vmatpush1.xpose.msra.mxu0 0.0
    %379 = vmatprep.subr.mxu0 0.0
    %380 = vmatpush1.xpose.msra.mxu0 0.0
    %381 = vmatprep.subr.mxu0 0.0
    %382 = vmatpush1.xpose.msra.mxu0 0.0
    %383 = vmatprep.subr.mxu0 0.0
    %384 = vmatpush1.xpose.msra.mxu0 0.0
    %385 = vmatprep.subr.mxu0 0.0
    %386 = vmatpush1.xpose.msra.mxu0 0.0
    %387 = vmatprep.subr.mxu0 0.0
    %388 = vmatpush1.xpose.msra.mxu0 0.0
    %389 = vmatprep.subr.mxu0 0.0
    %390 = vmatpush1.xpose.msra.mxu0 0.0
    %391 = vmatprep.subr.mxu0 0.0
    %392 = vmatpush1.xpose.msra.mxu0 0.0
    %393 = vmatprep.subr.mxu0 0.0
    %394 = vmatpush1.xpose.msra.mxu0 0.0
    %395 = vmatprep.subr.mxu0 0.0
    %396 = vmatpush1.xpose.msra.mxu0 0.0
    %397 = vmatprep.subr.mxu0 0.0
    %398 = vmatpush1.xpose.msra.mxu0 0.0
    %399 = vmatprep.mubr.f32.mxu0 0.0
    %v400 = vand.u32 %v75, 4294901760
    %401 = vmatmul.mubr.f32.gmra.mrb[0].mxu0 %v400
    %v402 = vpop.f32.mrb[0].mxu0
    %v403 = vadd.f32 %v222, %v402
    %v404 = vpop.f32.mrb[0].mxu0
    %405 = vmatprep.mubr.f32.mxu0 0.0
    %v406 = vand.u32 %v78, 4294901760
    %407 = vmatmul.mubr.f32.gmra.mrb[0].mxu0 %v406
    %v408 = vpop.f32.mrb[0].mxu0
    %v409 = vadd.f32 %v232, %v408
    %v410 = vpop.f32.mrb[0].mxu0
    %411 = vmatprep.mubr.f32.mxu0 0.0
    %v412 = vand.u32 %v81, 4294901760
    %413 = vmatmul.mubr.f32.gmra.mrb[0].mxu0 %v412
    %v414 = vpop.f32.mrb[0].mxu0
    %v415 = vadd.f32 %v242, %v414
    %v416 = vpop.f32.mrb[0].mxu0
    %417 = vmatprep.mubr.f32.mxu0 0.0
    %v418 = vand.u32 %v84, 4294901760
    %419 = vmatmul.mubr.f32.gmra.mrb[0].mxu0 %v418
    %v420 = vpop.f32.mrb[0].mxu0
    %v421 = vadd.f32 %v252, %v420
    %v422 = vpop.f32.mrb[0].mxu0
    %423 = vdwg.mxu0
    %424 = vmatprep.subr.mxu0 0.0
    %v425 = vand.u32 %v87, 4294901760
    %v426 = vsub.f32 %v87, %v425
    %427 = vmatpush1.xpose.msra.mxu0 %v426
    %428 = vmatprep.subr.mxu0 0.0
    %v429 = vand.u32 %v90, 4294901760
    %v430 = vsub.f32 %v90, %v429
    %431 = vmatpush1.xpose.msra.mxu0 %v430
    %432 = vmatprep.subr.mxu0 0.0
    %v433 = vand.u32 %v93, 4294901760
    %v434 = vsub.f32 %v93, %v433
    %435 = vmatpush1.xpose.msra.mxu0 %v434
    %436 = vmatprep.subr.mxu0 0.0
    %v437 = vand.u32 %v96, 4294901760
    %v438 = vsub.f32 %v96, %v437
    %439 = vmatpush1.xpose.msra.mxu0 %v438
    %440 = vmatprep.subr.mxu0 0.0
    %v441 = vand.u32 %v99, 4294901760
    %v442 = vsub.f32 %v99, %v441
    %443 = vmatpush1.xpose.msra.mxu0 %v442
    %444 = vmatprep.subr.mxu0 0.0
    %v445 = vand.u32 %v102, 4294901760
    %v446 = vsub.f32 %v102, %v445
    %447 = vmatpush1.xpose.msra.mxu0 %v446
    %448 = vmatprep.subr.mxu0 0.0
    %v449 = vand.u32 %v105, 4294901760
    %v450 = vsub.f32 %v105, %v449
    %451 = vmatpush1.xpose.msra.mxu0 %v450
    %452 = vmatprep.subr.mxu0 0.0
    %v453 = vand.u32 %v108, 4294901760
    %v454 = vsub.f32 %v108, %v453
    %455 = vmatpush1.xpose.msra.mxu0 %v454
    %456 = vmatprep.subr.mxu0 0.0
    %v457 = vand.u32 %v111, 4294901760
    %v458 = vsub.f32 %v111, %v457
    %459 = vmatpush1.xpose.msra.mxu0 %v458
    %460 = vmatprep.subr.mxu0 0.0
    %v461 = vand.u32 %v114, 4294901760
    %v462 = vsub.f32 %v114, %v461
    %463 = vmatpush1.xpose.msra.mxu0 %v462
    %464 = vmatprep.subr.mxu0 0.0
    %v465 = vand.u32 %v117, 4294901760
    %v466 = vsub.f32 %v117, %v465
    %467 = vmatpush1.xpose.msra.mxu0 %v466
    %468 = vmatprep.subr.mxu0 0.0
    %v469 = vand.u32 %v120, 4294901760
    %v470 = vsub.f32 %v120, %v469
    %471 = vmatpush1.xpose.msra.mxu0 %v470
    %472 = vmatprep.subr.mxu0 0.0
    %v473 = vand.u32 %v123, 4294901760
    %v474 = vsub.f32 %v123, %v473
    %475 = vmatpush1.xpose.msra.mxu0 %v474
    %476 = vmatprep.subr.mxu0 0.0
    %v477 = vand.u32 %v126, 4294901760
    %v478 = vsub.f32 %v126, %v477
    %479 = vmatpush1.xpose.msra.mxu0 %v478
    %480 = vmatprep.subr.mxu0 0.0
    %v481 = vand.u32 %v129, 4294901760
    %v482 = vsub.f32 %v129, %v481
    %483 = vmatpush1.xpose.msra.mxu0 %v482
    %484 = vmatprep.subr.mxu0 0.0
    %v485 = vand.u32 %v132, 4294901760
    %v486 = vsub.f32 %v132, %v485
    %487 = vmatpush1.xpose.msra.mxu0 %v486
    %488 = vmatprep.subr.mxu0 0.0
    %489 = vmatpush1.xpose.msra.mxu0 0.0
    %490 = vmatprep.subr.mxu0 0.0
    %491 = vmatpush1.xpose.msra.mxu0 0.0
    %492 = vmatprep.subr.mxu0 0.0
    %493 = vmatpush1.xpose.msra.mxu0 0.0
    %494 = vmatprep.subr.mxu0 0.0
    %495 = vmatpush1.xpose.msra.mxu0 0.0
    %496 = vmatprep.subr.mxu0 0.0
    %497 = vmatpush1.xpose.msra.mxu0 0.0
    %498 = vmatprep.subr.mxu0 0.0
    %499 = vmatpush1.xpose.msra.mxu0 0.0
    %500 = vmatprep.subr.mxu0 0.0
    %501 = vmatpush1.xpose.msra.mxu0 0.0
    %502 = vmatprep.subr.mxu0 0.0
    %503 = vmatpush1.xpose.msra.mxu0 0.0
    %504 = vmatprep.subr.mxu0 0.0
    %505 = vmatpush1.xpose.msra.mxu0 0.0
    %506 = vmatprep.subr.mxu0 0.0
    %507 = vmatpush1.xpose.msra.mxu0 0.0
    %508 = vmatprep.subr.mxu0 0.0
    %509 = vmatpush1.xpose.msra.mxu0 0.0
    %510 = vmatprep.subr.mxu0 0.0
    %511 = vmatpush1.xpose.msra.mxu0 0.0
    %512 = vmatprep.subr.mxu0 0.0
    %513 = vmatpush1.xpose.msra.mxu0 0.0
    %514 = vmatprep.subr.mxu0 0.0
    %515 = vmatpush1.xpose.msra.mxu0 0.0
    %516 = vmatprep.subr.mxu0 0.0
    %517 = vmatpush1.xpose.msra.mxu0 0.0
    %518 = vmatprep.subr.mxu0 0.0
    %519 = vmatpush1.xpose.msra.mxu0 0.0
    %520 = vmatprep.mubr.f32.mxu0 0.0
    %v521 = vand.u32 %v75, 4294901760
    %v522 = vsub.f32 %v75, %v521
    %523 = vmatmul.mubr.f32.gmra.mrb[0].mxu0 %v522
    %v524 = vpop.f32.mrb[0].mxu0
    %v525 = vadd.f32 %v403, %v524
    %v526 = vpop.f32.mrb[0].mxu0
    %527 = vmatprep.mubr.f32.mxu0 0.0
    %v528 = vand.u32 %v78, 4294901760
    %v529 = vsub.f32 %v78, %v528
    %530 = vmatmul.mubr.f32.gmra.mrb[0].mxu0 %v529
    %v531 = vpop.f32.mrb[0].mxu0
    %v532 = vadd.f32 %v409, %v531
    %v533 = vpop.f32.mrb[0].mxu0
    %534 = vmatprep.mubr.f32.mxu0 0.0
    %v535 = vand.u32 %v81, 4294901760
    %v536 = vsub.f32 %v81, %v535
    %537 = vmatmul.mubr.f32.gmra.mrb[0].mxu0 %v536
    %v538 = vpop.f32.mrb[0].mxu0
    %v539 = vadd.f32 %v415, %v538
    %v540 = vpop.f32.mrb[0].mxu0
    %541 = vmatprep.mubr.f32.mxu0 0.0
    %v542 = vand.u32 %v84, 4294901760
    %v543 = vsub.f32 %v84, %v542
    %544 = vmatmul.mubr.f32.gmra.mrb[0].mxu0 %v543
    %v545 = vpop.f32.mrb[0].mxu0
    %v546 = vadd.f32 %v421, %v545
    %v547 = vpop.f32.mrb[0].mxu0
    %548 = vdwg.mxu0
    %549 = vmatprep.subr.mxu0 0.0
    %v550 = vand.u32 %v87, 4294901760
    %551 = vmatpush1.xpose.msra.mxu0 %v550
    %552 = vmatprep.subr.mxu0 0.0
    %v553 = vand.u32 %v90, 4294901760
    %554 = vmatpush1.xpose.msra.mxu0 %v553
    %555 = vmatprep.subr.mxu0 0.0
    %v556 = vand.u32 %v93, 4294901760
    %557 = vmatpush1.xpose.msra.mxu0 %v556
    %558 = vmatprep.subr.mxu0 0.0
    %v559 = vand.u32 %v96, 4294901760
    %560 = vmatpush1.xpose.msra.mxu0 %v559
    %561 = vmatprep.subr.mxu0 0.0
    %v562 = vand.u32 %v99, 4294901760
    %563 = vmatpush1.xpose.msra.mxu0 %v562
    %564 = vmatprep.subr.mxu0 0.0
    %v565 = vand.u32 %v102, 4294901760
    %566 = vmatpush1.xpose.msra.mxu0 %v565
    %567 = vmatprep.subr.mxu0 0.0
    %v568 = vand.u32 %v105, 4294901760
    %569 = vmatpush1.xpose.msra.mxu0 %v568
    %570 = vmatprep.subr.mxu0 0.0
    %v571 = vand.u32 %v108, 4294901760
    %572 = vmatpush1.xpose.msra.mxu0 %v571
    %573 = vmatprep.subr.mxu0 0.0
    %v574 = vand.u32 %v111, 4294901760
    %575 = vmatpush1.xpose.msra.mxu0 %v574
    %576 = vmatprep.subr.mxu0 0.0
    %v577 = vand.u32 %v114, 4294901760
    %578 = vmatpush1.xpose.msra.mxu0 %v577
    %579 = vmatprep.subr.mxu0 0.0
    %v580 = vand.u32 %v117, 4294901760
    %581 = vmatpush1.xpose.msra.mxu0 %v580
    %582 = vmatprep.subr.mxu0 0.0
    %v583 = vand.u32 %v120, 4294901760
    %584 = vmatpush1.xpose.msra.mxu0 %v583
    %585 = vmatprep.subr.mxu0 0.0
    %v586 = vand.u32 %v123, 4294901760
    %587 = vmatpush1.xpose.msra.mxu0 %v586
    %588 = vmatprep.subr.mxu0 0.0
    %v589 = vand.u32 %v126, 4294901760
    %590 = vmatpush1.xpose.msra.mxu0 %v589
    %591 = vmatprep.subr.mxu0 0.0
    %v592 = vand.u32 %v129, 4294901760
    %593 = vmatpush1.xpose.msra.mxu0 %v592
    %594 = vmatprep.subr.mxu0 0.0
    %v595 = vand.u32 %v132, 4294901760
    %596 = vmatpush1.xpose.msra.mxu0 %v595
    %597 = vmatprep.subr.mxu0 0.0
    %598 = vmatpush1.xpose.msra.mxu0 0.0
    %599 = vmatprep.subr.mxu0 0.0
    %600 = vmatpush1.xpose.msra.mxu0 0.0
    %601 = vmatprep.subr.mxu0 0.0
    %602 = vmatpush1.xpose.msra.mxu0 0.0
    %603 = vmatprep.subr.mxu0 0.0
    %604 = vmatpush1.xpose.msra.mxu0 0.0
    %605 = vmatprep.subr.mxu0 0.0
    %606 = vmatpush1.xpose.msra.mxu0 0.0
    %607 = vmatprep.subr.mxu0 0.0
    %608 = vmatpush1.xpose.msra.mxu0 0.0
    %609 = vmatprep.subr.mxu0 0.0
    %610 = vmatpush1.xpose.msra.mxu0 0.0
    %611 = vmatprep.subr.mxu0 0.0
    %612 = vmatpush1.xpose.msra.mxu0 0.0
    %613 = vmatprep.subr.mxu0 0.0
    %614 = vmatpush1.xpose.msra.mxu0 0.0
    %615 = vmatprep.subr.mxu0 0.0
    %616 = vmatpush1.xpose.msra.mxu0 0.0
    %617 = vmatprep.subr.mxu0 0.0
    %618 = vmatpush1.xpose.msra.mxu0 0.0
    %619 = vmatprep.subr.mxu0 0.0
    %620 = vmatpush1.xpose.msra.mxu0 0.0
    %621 = vmatprep.subr.mxu0 0.0
    %622 = vmatpush1.xpose.msra.mxu0 0.0
    %623 = vmatprep.subr.mxu0 0.0
    %624 = vmatpush1.xpose.msra.mxu0 0.0
    %625 = vmatprep.subr.mxu0 0.0
    %626 = vmatpush1.xpose.msra.mxu0 0.0
    %627 = vmatprep.subr.mxu0 0.0
    %628 = vmatpush1.xpose.msra.mxu0 0.0
    %629 = vmatprep.mubr.f32.mxu0 0.0
    %v630 = vand.u32 %v75, 4294901760
    %v631 = vsub.f32 %v75, %v630
    %v632 = vand.u32 %v631, 4294901760
    %633 = vmatmul.mubr.f32.gmra.mrb[0].mxu0 %v632
    %v634 = vpop.f32.mrb[0].mxu0
    %v635 = vadd.f32 %v525, %v634
    %v636 = vpop.f32.mrb[0].mxu0
    %637 = vmatprep.mubr.f32.mxu0 0.0
    %v638 = vand.u32 %v78, 4294901760
    %v639 = vsub.f32 %v78, %v638
    %v640 = vand.u32 %v639, 4294901760
    %641 = vmatmul.mubr.f32.gmra.mrb[0].mxu0 %v640
    %v642 = vpop.f32.mrb[0].mxu0
    %v643 = vadd.f32 %v532, %v642
    %v644 = vpop.f32.mrb[0].mxu0
    %645 = vmatprep.mubr.f32.mxu0 0.0
    %v646 = vand.u32 %v81, 4294901760
    %v647 = vsub.f32 %v81, %v646
    %v648 = vand.u32 %v647, 4294901760
    %649 = vmatmul.mubr.f32.gmra.mrb[0].mxu0 %v648
    %v650 = vpop.f32.mrb[0].mxu0
    %v651 = vadd.f32 %v539, %v650
    %v652 = vpop.f32.mrb[0].mxu0
    %653 = vmatprep.mubr.f32.mxu0 0.0
    %v654 = vand.u32 %v84, 4294901760
    %v655 = vsub.f32 %v84, %v654
    %v656 = vand.u32 %v655, 4294901760
    %657 = vmatmul.mubr.f32.gmra.mrb[0].mxu0 %v656
    %v658 = vpop.f32.mrb[0].mxu0
    %v659 = vadd.f32 %v546, %v658
    %v660 = vpop.f32.mrb[0].mxu0
    %661 = vdwg.mxu0
    %662 = vmatprep.subr.mxu0 0.0
    %v663 = vand.u32 %v87, 4294901760
    %v664 = vsub.f32 %v87, %v663
    %v665 = vand.u32 %v664, 4294901760
    %666 = vmatpush1.xpose.msra.mxu0 %v665
    %667 = vmatprep.subr.mxu0 0.0
    %v668 = vand.u32 %v90, 4294901760
    %v669 = vsub.f32 %v90, %v668
    %v670 = vand.u32 %v669, 4294901760
    %671 = vmatpush1.xpose.msra.mxu0 %v670
    %672 = vmatprep.subr.mxu0 0.0
    %v673 = vand.u32 %v93, 4294901760
    %v674 = vsub.f32 %v93, %v673
    %v675 = vand.u32 %v674, 4294901760
    %676 = vmatpush1.xpose.msra.mxu0 %v675
    %677 = vmatprep.subr.mxu0 0.0
    %v678 = vand.u32 %v96, 4294901760
    %v679 = vsub.f32 %v96, %v678
    %v680 = vand.u32 %v679, 4294901760
    %681 = vmatpush1.xpose.msra.mxu0 %v680
    %682 = vmatprep.subr.mxu0 0.0
    %v683 = vand.u32 %v99, 4294901760
    %v684 = vsub.f32 %v99, %v683
    %v685 = vand.u32 %v684, 4294901760
    %686 = vmatpush1.xpose.msra.mxu0 %v685
    %687 = vmatprep.subr.mxu0 0.0
    %v688 = vand.u32 %v102, 4294901760
    %v689 = vsub.f32 %v102, %v688
    %v690 = vand.u32 %v689, 4294901760
    %691 = vmatpush1.xpose.msra.mxu0 %v690
    %692 = vmatprep.subr.mxu0 0.0
    %v693 = vand.u32 %v105, 4294901760
    %v694 = vsub.f32 %v105, %v693
    %v695 = vand.u32 %v694, 4294901760
    %696 = vmatpush1.xpose.msra.mxu0 %v695
    %697 = vmatprep.subr.mxu0 0.0
    %v698 = vand.u32 %v108, 4294901760
    %v699 = vsub.f32 %v108, %v698
    %v700 = vand.u32 %v699, 4294901760
    %701 = vmatpush1.xpose.msra.mxu0 %v700
    %702 = vmatprep.subr.mxu0 0.0
    %v703 = vand.u32 %v111, 4294901760
    %v704 = vsub.f32 %v111, %v703
    %v705 = vand.u32 %v704, 4294901760
    %706 = vmatpush1.xpose.msra.mxu0 %v705
    %707 = vmatprep.subr.mxu0 0.0
    %v708 = vand.u32 %v114, 4294901760
    %v709 = vsub.f32 %v114, %v708
    %v710 = vand.u32 %v709, 4294901760
    %711 = vmatpush1.xpose.msra.mxu0 %v710
    %712 = vmatprep.subr.mxu0 0.0
    %v713 = vand.u32 %v117, 4294901760
    %v714 = vsub.f32 %v117, %v713
    %v715 = vand.u32 %v714, 4294901760
    %716 = vmatpush1.xpose.msra.mxu0 %v715
    %717 = vmatprep.subr.mxu0 0.0
    %v718 = vand.u32 %v120, 4294901760
    %v719 = vsub.f32 %v120, %v718
    %v720 = vand.u32 %v719, 4294901760
    %721 = vmatpush1.xpose.msra.mxu0 %v720
    %722 = vmatprep.subr.mxu0 0.0
    %v723 = vand.u32 %v123, 4294901760
    %v724 = vsub.f32 %v123, %v723
    %v725 = vand.u32 %v724, 4294901760
    %726 = vmatpush1.xpose.msra.mxu0 %v725
    %727 = vmatprep.subr.mxu0 0.0
    %v728 = vand.u32 %v126, 4294901760
    %v729 = vsub.f32 %v126, %v728
    %v730 = vand.u32 %v729, 4294901760
    %731 = vmatpush1.xpose.msra.mxu0 %v730
    %732 = vmatprep.subr.mxu0 0.0
    %v733 = vand.u32 %v129, 4294901760
    %v734 = vsub.f32 %v129, %v733
    %v735 = vand.u32 %v734, 4294901760
    %736 = vmatpush1.xpose.msra.mxu0 %v735
    %737 = vmatprep.subr.mxu0 0.0
    %v738 = vand.u32 %v132, 4294901760
    %v739 = vsub.f32 %v132, %v738
    %v740 = vand.u32 %v739, 4294901760
    %741 = vmatpush1.xpose.msra.mxu0 %v740
    %742 = vmatprep.subr.mxu0 0.0
    %743 = vmatpush1.xpose.msra.mxu0 0.0
    %744 = vmatprep.subr.mxu0 0.0
    %745 = vmatpush1.xpose.msra.mxu0 0.0
    %746 = vmatprep.subr.mxu0 0.0
    %747 = vmatpush1.xpose.msra.mxu0 0.0
    %748 = vmatprep.subr.mxu0 0.0
    %749 = vmatpush1.xpose.msra.mxu0 0.0
    %750 = vmatprep.subr.mxu0 0.0
    %751 = vmatpush1.xpose.msra.mxu0 0.0
    %752 = vmatprep.subr.mxu0 0.0
    %753 = vmatpush1.xpose.msra.mxu0 0.0
    %754 = vmatprep.subr.mxu0 0.0
    %755 = vmatpush1.xpose.msra.mxu0 0.0
    %756 = vmatprep.subr.mxu0 0.0
    %757 = vmatpush1.xpose.msra.mxu0 0.0
    %758 = vmatprep.subr.mxu0 0.0
    %759 = vmatpush1.xpose.msra.mxu0 0.0
    %760 = vmatprep.subr.mxu0 0.0
    %761 = vmatpush1.xpose.msra.mxu0 0.0
    %762 = vmatprep.subr.mxu0 0.0
    %763 = vmatpush1.xpose.msra.mxu0 0.0
    %764 = vmatprep.subr.mxu0 0.0
    %765 = vmatpush1.xpose.msra.mxu0 0.0
    %766 = vmatprep.subr.mxu0 0.0
    %767 = vmatpush1.xpose.msra.mxu0 0.0
    %768 = vmatprep.subr.mxu0 0.0
    %769 = vmatpush1.xpose.msra.mxu0 0.0
    %770 = vmatprep.subr.mxu0 0.0
    %771 = vmatpush1.xpose.msra.mxu0 0.0
    %772 = vmatprep.subr.mxu0 0.0
    %773 = vmatpush1.xpose.msra.mxu0 0.0
    %774 = vmatprep.mubr.f32.mxu0 0.0
    %v775 = vand.u32 %v75, 4294901760
    %776 = vmatmul.mubr.f32.gmra.mrb[0].mxu0 %v775
    %v777 = vpop.f32.mrb[0].mxu0
    %v778 = vadd.f32 %v635, %v777
    %v779 = vpop.f32.mrb[0].mxu0
    %780 = vmatprep.mubr.f32.mxu0 0.0
    %v781 = vand.u32 %v78, 4294901760
    %782 = vmatmul.mubr.f32.gmra.mrb[0].mxu0 %v781
    %v783 = vpop.f32.mrb[0].mxu0
    %v784 = vadd.f32 %v643, %v783
    %v785 = vpop.f32.mrb[0].mxu0
    %786 = vmatprep.mubr.f32.mxu0 0.0
    %v787 = vand.u32 %v81, 4294901760
    %788 = vmatmul.mubr.f32.gmra.mrb[0].mxu0 %v787
    %v789 = vpop.f32.mrb[0].mxu0
    %v790 = vadd.f32 %v651, %v789
    %v791 = vpop.f32.mrb[0].mxu0
    %792 = vmatprep.mubr.f32.mxu0 0.0
    %v793 = vand.u32 %v84, 4294901760
    %794 = vmatmul.mubr.f32.gmra.mrb[0].mxu0 %v793
    %v795 = vpop.f32.mrb[0].mxu0
    %v796 = vadd.f32 %v659, %v795
    %v797 = vpop.f32.mrb[0].mxu0
    %798 = vdwg.mxu0
    %799 = vmatprep.subr.mxu0 0.0
    %v800 = vand.u32 %v87, 4294901760
    %801 = vmatpush1.xpose.msra.mxu0 %v800
    %802 = vmatprep.subr.mxu0 0.0
    %v803 = vand.u32 %v90, 4294901760
    %804 = vmatpush1.xpose.msra.mxu0 %v803
    %805 = vmatprep.subr.mxu0 0.0
    %v806 = vand.u32 %v93, 4294901760
    %807 = vmatpush1.xpose.msra.mxu0 %v806
    %808 = vmatprep.subr.mxu0 0.0
    %v809 = vand.u32 %v96, 4294901760
    %810 = vmatpush1.xpose.msra.mxu0 %v809
    %811 = vmatprep.subr.mxu0 0.0
    %v812 = vand.u32 %v99, 4294901760
    %813 = vmatpush1.xpose.msra.mxu0 %v812
    %814 = vmatprep.subr.mxu0 0.0
    %v815 = vand.u32 %v102, 4294901760
    %816 = vmatpush1.xpose.msra.mxu0 %v815
    %817 = vmatprep.subr.mxu0 0.0
    %v818 = vand.u32 %v105, 4294901760
    %819 = vmatpush1.xpose.msra.mxu0 %v818
    %820 = vmatprep.subr.mxu0 0.0
    %v821 = vand.u32 %v108, 4294901760
    %822 = vmatpush1.xpose.msra.mxu0 %v821
    %823 = vmatprep.subr.mxu0 0.0
    %v824 = vand.u32 %v111, 4294901760
    %825 = vmatpush1.xpose.msra.mxu0 %v824
    %826 = vmatprep.subr.mxu0 0.0
    %v827 = vand.u32 %v114, 4294901760
    %828 = vmatpush1.xpose.msra.mxu0 %v827
    %829 = vmatprep.subr.mxu0 0.0
    %v830 = vand.u32 %v117, 4294901760
    %831 = vmatpush1.xpose.msra.mxu0 %v830
    %832 = vmatprep.subr.mxu0 0.0
    %v833 = vand.u32 %v120, 4294901760
    %834 = vmatpush1.xpose.msra.mxu0 %v833
    %835 = vmatprep.subr.mxu0 0.0
    %v836 = vand.u32 %v123, 4294901760
    %837 = vmatpush1.xpose.msra.mxu0 %v836
    %838 = vmatprep.subr.mxu0 0.0
    %v839 = vand.u32 %v126, 4294901760
    %840 = vmatpush1.xpose.msra.mxu0 %v839
    %841 = vmatprep.subr.mxu0 0.0
    %v842 = vand.u32 %v129, 4294901760
    %843 = vmatpush1.xpose.msra.mxu0 %v842
    %844 = vmatprep.subr.mxu0 0.0
    %v845 = vand.u32 %v132, 4294901760
    %846 = vmatpush1.xpose.msra.mxu0 %v845
    %847 = vmatprep.subr.mxu0 0.0
    %848 = vmatpush1.xpose.msra.mxu0 0.0
    %849 = vmatprep.subr.mxu0 0.0
    %850 = vmatpush1.xpose.msra.mxu0 0.0
    %851 = vmatprep.subr.mxu0 0.0
    %852 = vmatpush1.xpose.msra.mxu0 0.0
    %853 = vmatprep.subr.mxu0 0.0
    %854 = vmatpush1.xpose.msra.mxu0 0.0
    %855 = vmatprep.subr.mxu0 0.0
    %856 = vmatpush1.xpose.msra.mxu0 0.0
    %857 = vmatprep.subr.mxu0 0.0
    %858 = vmatpush1.xpose.msra.mxu0 0.0
    %859 = vmatprep.subr.mxu0 0.0
    %860 = vmatpush1.xpose.msra.mxu0 0.0
    %861 = vmatprep.subr.mxu0 0.0
    %862 = vmatpush1.xpose.msra.mxu0 0.0
    %863 = vmatprep.subr.mxu0 0.0
    %864 = vmatpush1.xpose.msra.mxu0 0.0
    %865 = vmatprep.subr.mxu0 0.0
    %866 = vmatpush1.xpose.msra.mxu0 0.0
    %867 = vmatprep.subr.mxu0 0.0
    %868 = vmatpush1.xpose.msra.mxu0 0.0
    %869 = vmatprep.subr.mxu0 0.0
    %870 = vmatpush1.xpose.msra.mxu0 0.0
    %871 = vmatprep.subr.mxu0 0.0
    %872 = vmatpush1.xpose.msra.mxu0 0.0
    %873 = vmatprep.subr.mxu0 0.0
    %874 = vmatpush1.xpose.msra.mxu0 0.0
    %875 = vmatprep.subr.mxu0 0.0
    %876 = vmatpush1.xpose.msra.mxu0 0.0
    %877 = vmatprep.subr.mxu0 0.0
    %878 = vmatpush1.xpose.msra.mxu0 0.0
    %879 = vmatprep.mubr.f32.mxu0 0.0
    %v880 = vand.u32 %v75, 4294901760
    %881 = vmatmul.mubr.f32.gmra.mrb[0].mxu0 %v880
    %v882 = vpop.f32.mrb[0].mxu0
    %v883 = vadd.f32 %v778, %v882
    %v884 = vpop.f32.mrb[0].mxu0
    %885 = vmatprep.mubr.f32.mxu0 0.0
    %v886 = vand.u32 %v78, 4294901760
    %887 = vmatmul.mubr.f32.gmra.mrb[0].mxu0 %v886
    %v888 = vpop.f32.mrb[0].mxu0
    %v889 = vadd.f32 %v784, %v888
    %v890 = vpop.f32.mrb[0].mxu0
    %891 = vmatprep.mubr.f32.mxu0 0.0
    %v892 = vand.u32 %v81, 4294901760
    %893 = vmatmul.mubr.f32.gmra.mrb[0].mxu0 %v892
    %v894 = vpop.f32.mrb[0].mxu0
    %v895 = vadd.f32 %v790, %v894
    %v896 = vpop.f32.mrb[0].mxu0
    %897 = vmatprep.mubr.f32.mxu0 0.0
    %v898 = vand.u32 %v84, 4294901760
    %899 = vmatmul.mubr.f32.gmra.mrb[0].mxu0 %v898
    %v900 = vpop.f32.mrb[0].mxu0
    %v901 = vadd.f32 %v796, %v900
    %v902 = vpop.f32.mrb[0].mxu0
    %903 = vdwg.mxu0
    %v904 = vmax.f32 %v883, 0.0
    %v905 = vmax.f32 %v889, 0.0
    %v906 = vmax.f32 %v895, 0.0
    %v907 = vmax.f32 %v901, 0.0
    %v908 = vld [vmem:[%s3] sm:$0xff]
    %v909 = vld [vmem:[%s3 + $0x8] sm:$0x1f]
    %v910 = vld [vmem:[%s4] sm:$0xff]
    %v911 = vld [vmem:[%s4 + $0x8] sm:$0x1f]
    %913 = vset.pattern.permute.xlu0 0
    %914 = vperm.xlu0 %913, %v910
    %v915 = vpop.permute.xlu0 %914
    %918 = vset.pattern.permute.xlu0 0
    %919 = vperm.xlu0 %918, %v911
    %v920 = vpop.permute.xlu0 %919
    %vm922 = vcmask 211968
    %v924 = vsel %vm922, %v908, 0
    %v927 = vsel %vm922, %v909, 0
    %vm929 = vcmask 1041408
    %v931 = vsel %vm929, %v907, 0
    %933 = vmatprep.subr.mxu0 0.0
    %v934 = vand.u32 %v904, 4294901760
    %935 = vmatpush1.msra.mxu0 %v934
    %936 = vmatprep.subr.mxu0 0.0
    %v937 = vand.u32 %v905, 4294901760
    %938 = vmatpush1.msra.mxu0 %v937
    %939 = vmatprep.subr.mxu0 0.0
    %v940 = vand.u32 %v906, 4294901760
    %941 = vmatpush1.msra.mxu0 %v940
    %942 = vmatprep.subr.mxu0 0.0
    %v943 = vand.u32 %v931, 4294901760
    %944 = vmatpush1.msra.mxu0 %v943
    %945 = vmatprep.subr.mxu0 0.0
    %946 = vmatpush1.msra.mxu0 0.0
    %947 = vmatprep.subr.mxu0 0.0
    %948 = vmatpush1.msra.mxu0 0.0
    %949 = vmatprep.subr.mxu0 0.0
    %950 = vmatpush1.msra.mxu0 0.0
    %951 = vmatprep.subr.mxu0 0.0
    %952 = vmatpush1.msra.mxu0 0.0
    %953 = vmatprep.subr.mxu0 0.0
    %954 = vmatpush1.msra.mxu0 0.0
    %955 = vmatprep.subr.mxu0 0.0
    %956 = vmatpush1.msra.mxu0 0.0
    %957 = vmatprep.subr.mxu0 0.0
    %958 = vmatpush1.msra.mxu0 0.0
    %959 = vmatprep.subr.mxu0 0.0
    %960 = vmatpush1.msra.mxu0 0.0
    %961 = vmatprep.subr.mxu0 0.0
    %962 = vmatpush1.msra.mxu0 0.0
    %963 = vmatprep.subr.mxu0 0.0
    %964 = vmatpush1.msra.mxu0 0.0
    %965 = vmatprep.subr.mxu0 0.0
    %966 = vmatpush1.msra.mxu0 0.0
    %967 = vmatprep.subr.mxu0 0.0
    %968 = vmatpush1.msra.mxu0 0.0
    %969 = vmatprep.subr.mxu0 0.0
    %970 = vmatpush1.msra.mxu0 0.0
    %971 = vmatprep.subr.mxu0 0.0
    %972 = vmatpush1.msra.mxu0 0.0
    %973 = vmatprep.subr.mxu0 0.0
    %974 = vmatpush1.msra.mxu0 0.0
    %975 = vmatprep.subr.mxu0 0.0
    %976 = vmatpush1.msra.mxu0 0.0
    %977 = vmatprep.subr.mxu0 0.0
    %978 = vmatpush1.msra.mxu0 0.0
    %979 = vmatprep.subr.mxu0 0.0
    %980 = vmatpush1.msra.mxu0 0.0
    %981 = vmatprep.subr.mxu0 0.0
    %982 = vmatpush1.msra.mxu0 0.0
    %983 = vmatprep.subr.mxu0 0.0
    %984 = vmatpush1.msra.mxu0 0.0
    %985 = vmatprep.subr.mxu0 0.0
    %986 = vmatpush1.msra.mxu0 0.0
    %987 = vmatprep.subr.mxu0 0.0
    %988 = vmatpush1.msra.mxu0 0.0
    %989 = vmatprep.subr.mxu0 0.0
    %990 = vmatpush1.msra.mxu0 0.0
    %991 = vmatprep.subr.mxu0 0.0
    %992 = vmatpush1.msra.mxu0 0.0
    %993 = vmatprep.subr.mxu0 0.0
    %994 = vmatpush1.msra.mxu0 0.0
    %995 = vmatprep.subr.mxu0 0.0
    %996 = vmatpush1.msra.mxu0 0.0
    %997 = vmatprep.subr.mxu0 0.0
    %998 = vmatpush1.msra.mxu0 0.0
    %999 = vmatprep.subr.mxu0 0.0
    %1000 = vmatpush1.msra.mxu0 0.0
    %1001 = vmatprep.mubr.f32.mxu0 0.0
    %v1002 = vand.u32 %v924, 4294901760
    %v1003 = vsub.f32 %v924, %v1002
    %v1004 = vand.u32 %v1003, 4294901760
    %v1005 = vsub.f32 %v1003, %v1004
    %v1006 = vand.u32 %v1005, 4294901760
    %1007 = vmatmul.mubr.f32.gmra.mrb[0].mxu0 %v1006
    %v1008 = vpop.f32.mrb[0].mxu0
    %v1009 = vadd.f32 %v915, %v1008
    %v1010 = vpop.f32.mrb[0].mxu0
    %1011 = vmatprep.mubr.f32.mxu0 0.0
    %v1012 = vand.u32 %v927, 4294901760
    %v1013 = vsub.f32 %v927, %v1012
    %v1014 = vand.u32 %v1013, 4294901760
    %v1015 = vsub.f32 %v1013, %v1014
    %v1016 = vand.u32 %v1015, 4294901760
    %1017 = vmatmul.mubr.f32.gmra.mrb[0].mxu0 %v1016
    %v1018 = vpop.f32.mrb[0].mxu0
    %v1019 = vadd.f32 %v920, %v1018
    %v1020 = vpop.f32.mrb[0].mxu0
    %1021 = vdwg.mxu0
    %1022 = vmatprep.subr.mxu0 0.0
    %v1023 = vand.u32 %v904, 4294901760
    %v1024 = vsub.f32 %v904, %v1023
    %v1025 = vand.u32 %v1024, 4294901760
    %v1026 = vsub.f32 %v1024, %v1025
    %v1027 = vand.u32 %v1026, 4294901760
    %1028 = vmatpush1.msra.mxu0 %v1027
    %1029 = vmatprep.subr.mxu0 0.0
    %v1030 = vand.u32 %v905, 4294901760
    %v1031 = vsub.f32 %v905, %v1030
    %v1032 = vand.u32 %v1031, 4294901760
    %v1033 = vsub.f32 %v1031, %v1032
    %v1034 = vand.u32 %v1033, 4294901760
    %1035 = vmatpush1.msra.mxu0 %v1034
    %1036 = vmatprep.subr.mxu0 0.0
    %v1037 = vand.u32 %v906, 4294901760
    %v1038 = vsub.f32 %v906, %v1037
    %v1039 = vand.u32 %v1038, 4294901760
    %v1040 = vsub.f32 %v1038, %v1039
    %v1041 = vand.u32 %v1040, 4294901760
    %1042 = vmatpush1.msra.mxu0 %v1041
    %1043 = vmatprep.subr.mxu0 0.0
    %v1044 = vand.u32 %v931, 4294901760
    %v1045 = vsub.f32 %v931, %v1044
    %v1046 = vand.u32 %v1045, 4294901760
    %v1047 = vsub.f32 %v1045, %v1046
    %v1048 = vand.u32 %v1047, 4294901760
    %1049 = vmatpush1.msra.mxu0 %v1048
    %1050 = vmatprep.subr.mxu0 0.0
    %1051 = vmatpush1.msra.mxu0 0.0
    %1052 = vmatprep.subr.mxu0 0.0
    %1053 = vmatpush1.msra.mxu0 0.0
    %1054 = vmatprep.subr.mxu0 0.0
    %1055 = vmatpush1.msra.mxu0 0.0
    %1056 = vmatprep.subr.mxu0 0.0
    %1057 = vmatpush1.msra.mxu0 0.0
    %1058 = vmatprep.subr.mxu0 0.0
    %1059 = vmatpush1.msra.mxu0 0.0
    %1060 = vmatprep.subr.mxu0 0.0
    %1061 = vmatpush1.msra.mxu0 0.0
    %1062 = vmatprep.subr.mxu0 0.0
    %1063 = vmatpush1.msra.mxu0 0.0
    %1064 = vmatprep.subr.mxu0 0.0
    %1065 = vmatpush1.msra.mxu0 0.0
    %1066 = vmatprep.subr.mxu0 0.0
    %1067 = vmatpush1.msra.mxu0 0.0
    %1068 = vmatprep.subr.mxu0 0.0
    %1069 = vmatpush1.msra.mxu0 0.0
    %1070 = vmatprep.subr.mxu0 0.0
    %1071 = vmatpush1.msra.mxu0 0.0
    %1072 = vmatprep.subr.mxu0 0.0
    %1073 = vmatpush1.msra.mxu0 0.0
    %1074 = vmatprep.subr.mxu0 0.0
    %1075 = vmatpush1.msra.mxu0 0.0
    %1076 = vmatprep.subr.mxu0 0.0
    %1077 = vmatpush1.msra.mxu0 0.0
    %1078 = vmatprep.subr.mxu0 0.0
    %1079 = vmatpush1.msra.mxu0 0.0
    %1080 = vmatprep.subr.mxu0 0.0
    %1081 = vmatpush1.msra.mxu0 0.0
    %1082 = vmatprep.subr.mxu0 0.0
    %1083 = vmatpush1.msra.mxu0 0.0
    %1084 = vmatprep.subr.mxu0 0.0
    %1085 = vmatpush1.msra.mxu0 0.0
    %1086 = vmatprep.subr.mxu0 0.0
    %1087 = vmatpush1.msra.mxu0 0.0
    %1088 = vmatprep.subr.mxu0 0.0
    %1089 = vmatpush1.msra.mxu0 0.0
    %1090 = vmatprep.subr.mxu0 0.0
    %1091 = vmatpush1.msra.mxu0 0.0
    %1092 = vmatprep.subr.mxu0 0.0
    %1093 = vmatpush1.msra.mxu0 0.0
    %1094 = vmatprep.subr.mxu0 0.0
    %1095 = vmatpush1.msra.mxu0 0.0
    %1096 = vmatprep.subr.mxu0 0.0
    %1097 = vmatpush1.msra.mxu0 0.0
    %1098 = vmatprep.subr.mxu0 0.0
    %1099 = vmatpush1.msra.mxu0 0.0
    %1100 = vmatprep.subr.mxu0 0.0
    %1101 = vmatpush1.msra.mxu0 0.0
    %1102 = vmatprep.subr.mxu0 0.0
    %1103 = vmatpush1.msra.mxu0 0.0
    %1104 = vmatprep.subr.mxu0 0.0
    %1105 = vmatpush1.msra.mxu0 0.0
    %1106 = vmatprep.mubr.f32.mxu0 0.0
    %v1107 = vand.u32 %v924, 4294901760
    %1108 = vmatmul.mubr.f32.gmra.mrb[0].mxu0 %v1107
    %v1109 = vpop.f32.mrb[0].mxu0
    %v1110 = vadd.f32 %v1009, %v1109
    %v1111 = vpop.f32.mrb[0].mxu0
    %1112 = vmatprep.mubr.f32.mxu0 0.0
    %v1113 = vand.u32 %v927, 4294901760
    %1114 = vmatmul.mubr.f32.gmra.mrb[0].mxu0 %v1113
    %v1115 = vpop.f32.mrb[0].mxu0
    %v1116 = vadd.f32 %v1019, %v1115
    %v1117 = vpop.f32.mrb[0].mxu0
    %1118 = vdwg.mxu0
    %1119 = vmatprep.subr.mxu0 0.0
    %v1120 = vand.u32 %v904, 4294901760
    %v1121 = vsub.f32 %v904, %v1120
    %1122 = vmatpush1.msra.mxu0 %v1121
    %1123 = vmatprep.subr.mxu0 0.0
    %v1124 = vand.u32 %v905, 4294901760
    %v1125 = vsub.f32 %v905, %v1124
    %1126 = vmatpush1.msra.mxu0 %v1125
    %1127 = vmatprep.subr.mxu0 0.0
    %v1128 = vand.u32 %v906, 4294901760
    %v1129 = vsub.f32 %v906, %v1128
    %1130 = vmatpush1.msra.mxu0 %v1129
    %1131 = vmatprep.subr.mxu0 0.0
    %v1132 = vand.u32 %v931, 4294901760
    %v1133 = vsub.f32 %v931, %v1132
    %1134 = vmatpush1.msra.mxu0 %v1133
    %1135 = vmatprep.subr.mxu0 0.0
    %1136 = vmatpush1.msra.mxu0 0.0
    %1137 = vmatprep.subr.mxu0 0.0
    %1138 = vmatpush1.msra.mxu0 0.0
    %1139 = vmatprep.subr.mxu0 0.0
    %1140 = vmatpush1.msra.mxu0 0.0
    %1141 = vmatprep.subr.mxu0 0.0
    %1142 = vmatpush1.msra.mxu0 0.0
    %1143 = vmatprep.subr.mxu0 0.0
    %1144 = vmatpush1.msra.mxu0 0.0
    %1145 = vmatprep.subr.mxu0 0.0
    %1146 = vmatpush1.msra.mxu0 0.0
    %1147 = vmatprep.subr.mxu0 0.0
    %1148 = vmatpush1.msra.mxu0 0.0
    %1149 = vmatprep.subr.mxu0 0.0
    %1150 = vmatpush1.msra.mxu0 0.0
    %1151 = vmatprep.subr.mxu0 0.0
    %1152 = vmatpush1.msra.mxu0 0.0
    %1153 = vmatprep.subr.mxu0 0.0
    %1154 = vmatpush1.msra.mxu0 0.0
    %1155 = vmatprep.subr.mxu0 0.0
    %1156 = vmatpush1.msra.mxu0 0.0
    %1157 = vmatprep.subr.mxu0 0.0
    %1158 = vmatpush1.msra.mxu0 0.0
    %1159 = vmatprep.subr.mxu0 0.0
    %1160 = vmatpush1.msra.mxu0 0.0
    %1161 = vmatprep.subr.mxu0 0.0
    %1162 = vmatpush1.msra.mxu0 0.0
    %1163 = vmatprep.subr.mxu0 0.0
    %1164 = vmatpush1.msra.mxu0 0.0
    %1165 = vmatprep.subr.mxu0 0.0
    %1166 = vmatpush1.msra.mxu0 0.0
    %1167 = vmatprep.subr.mxu0 0.0
    %1168 = vmatpush1.msra.mxu0 0.0
    %1169 = vmatprep.subr.mxu0 0.0
    %1170 = vmatpush1.msra.mxu0 0.0
    %1171 = vmatprep.subr.mxu0 0.0
    %1172 = vmatpush1.msra.mxu0 0.0
    %1173 = vmatprep.subr.mxu0 0.0
    %1174 = vmatpush1.msra.mxu0 0.0
    %1175 = vmatprep.subr.mxu0 0.0
    %1176 = vmatpush1.msra.mxu0 0.0
    %1177 = vmatprep.subr.mxu0 0.0
    %1178 = vmatpush1.msra.mxu0 0.0
    %1179 = vmatprep.subr.mxu0 0.0
    %1180 = vmatpush1.msra.mxu0 0.0
    %1181 = vmatprep.subr.mxu0 0.0
    %1182 = vmatpush1.msra.mxu0 0.0
    %1183 = vmatprep.subr.mxu0 0.0
    %1184 = vmatpush1.msra.mxu0 0.0
    %1185 = vmatprep.subr.mxu0 0.0
    %1186 = vmatpush1.msra.mxu0 0.0
    %1187 = vmatprep.subr.mxu0 0.0
    %1188 = vmatpush1.msra.mxu0 0.0
    %1189 = vmatprep.subr.mxu0 0.0
    %1190 = vmatpush1.msra.mxu0 0.0
    %1191 = vmatprep.mubr.f32.mxu0 0.0
    %v1192 = vand.u32 %v924, 4294901760
    %v1193 = vsub.f32 %v924, %v1192
    %1194 = vmatmul.mubr.f32.gmra.mrb[0].mxu0 %v1193
    %v1195 = vpop.f32.mrb[0].mxu0
    %v1196 = vadd.f32 %v1110, %v1195
    %v1197 = vpop.f32.mrb[0].mxu0
    %1198 = vmatprep.mubr.f32.mxu0 0.0
    %v1199 = vand.u32 %v927, 4294901760
    %v1200 = vsub.f32 %v927, %v1199
    %1201 = vmatmul.mubr.f32.gmra.mrb[0].mxu0 %v1200
    %v1202 = vpop.f32.mrb[0].mxu0
    %v1203 = vadd.f32 %v1116, %v1202
    %v1204 = vpop.f32.mrb[0].mxu0
    %1205 = vdwg.mxu0
    %1206 = vmatprep.subr.mxu0 0.0
    %v1207 = vand.u32 %v904, 4294901760
    %1208 = vmatpush1.msra.mxu0 %v1207
    %1209 = vmatprep.subr.mxu0 0.0
    %v1210 = vand.u32 %v905, 4294901760
    %1211 = vmatpush1.msra.mxu0 %v1210
    %1212 = vmatprep.subr.mxu0 0.0
    %v1213 = vand.u32 %v906, 4294901760
    %1214 = vmatpush1.msra.mxu0 %v1213
    %1215 = vmatprep.subr.mxu0 0.0
    %v1216 = vand.u32 %v931, 4294901760
    %1217 = vmatpush1.msra.mxu0 %v1216
    %1218 = vmatprep.subr.mxu0 0.0
    %1219 = vmatpush1.msra.mxu0 0.0
    %1220 = vmatprep.subr.mxu0 0.0
    %1221 = vmatpush1.msra.mxu0 0.0
    %1222 = vmatprep.subr.mxu0 0.0
    %1223 = vmatpush1.msra.mxu0 0.0
    %1224 = vmatprep.subr.mxu0 0.0
    %1225 = vmatpush1.msra.mxu0 0.0
    %1226 = vmatprep.subr.mxu0 0.0
    %1227 = vmatpush1.msra.mxu0 0.0
    %1228 = vmatprep.subr.mxu0 0.0
    %1229 = vmatpush1.msra.mxu0 0.0
    %1230 = vmatprep.subr.mxu0 0.0
    %1231 = vmatpush1.msra.mxu0 0.0
    %1232 = vmatprep.subr.mxu0 0.0
    %1233 = vmatpush1.msra.mxu0 0.0
    %1234 = vmatprep.subr.mxu0 0.0
    %1235 = vmatpush1.msra.mxu0 0.0
    %1236 = vmatprep.subr.mxu0 0.0
    %1237 = vmatpush1.msra.mxu0 0.0
    %1238 = vmatprep.subr.mxu0 0.0
    %1239 = vmatpush1.msra.mxu0 0.0
    %1240 = vmatprep.subr.mxu0 0.0
    %1241 = vmatpush1.msra.mxu0 0.0
    %1242 = vmatprep.subr.mxu0 0.0
    %1243 = vmatpush1.msra.mxu0 0.0
    %1244 = vmatprep.subr.mxu0 0.0
    %1245 = vmatpush1.msra.mxu0 0.0
    %1246 = vmatprep.subr.mxu0 0.0
    %1247 = vmatpush1.msra.mxu0 0.0
    %1248 = vmatprep.subr.mxu0 0.0
    %1249 = vmatpush1.msra.mxu0 0.0
    %1250 = vmatprep.subr.mxu0 0.0
    %1251 = vmatpush1.msra.mxu0 0.0
    %1252 = vmatprep.subr.mxu0 0.0
    %1253 = vmatpush1.msra.mxu0 0.0
    %1254 = vmatprep.subr.mxu0 0.0
    %1255 = vmatpush1.msra.mxu0 0.0
    %1256 = vmatprep.subr.mxu0 0.0
    %1257 = vmatpush1.msra.mxu0 0.0
    %1258 = vmatprep.subr.mxu0 0.0
    %1259 = vmatpush1.msra.mxu0 0.0
    %1260 = vmatprep.subr.mxu0 0.0
    %1261 = vmatpush1.msra.mxu0 0.0
    %1262 = vmatprep.subr.mxu0 0.0
    %1263 = vmatpush1.msra.mxu0 0.0
    %1264 = vmatprep.subr.mxu0 0.0
    %1265 = vmatpush1.msra.mxu0 0.0
    %1266 = vmatprep.subr.mxu0 0.0
    %1267 = vmatpush1.msra.mxu0 0.0
    %1268 = vmatprep.subr.mxu0 0.0
    %1269 = vmatpush1.msra.mxu0 0.0
    %1270 = vmatprep.subr.mxu0 0.0
    %1271 = vmatpush1.msra.mxu0 0.0
    %1272 = vmatprep.subr.mxu0 0.0
    %1273 = vmatpush1.msra.mxu0 0.0
    %1274 = vmatprep.mubr.f32.mxu0 0.0
    %v1275 = vand.u32 %v924, 4294901760
    %v1276 = vsub.f32 %v924, %v1275
    %v1277 = vand.u32 %v1276, 4294901760
    %1278 = vmatmul.mubr.f32.gmra.mrb[0].mxu0 %v1277
    %v1279 = vpop.f32.mrb[0].mxu0
    %v1280 = vadd.f32 %v1196, %v1279
    %v1281 = vpop.f32.mrb[0].mxu0
    %1282 = vmatprep.mubr.f32.mxu0 0.0
    %v1283 = vand.u32 %v927, 4294901760
    %v1284 = vsub.f32 %v927, %v1283
    %v1285 = vand.u32 %v1284, 4294901760
    %1286 = vmatmul.mubr.f32.gmra.mrb[0].mxu0 %v1285
    %v1287 = vpop.f32.mrb[0].mxu0
    %v1288 = vadd.f32 %v1203, %v1287
    %v1289 = vpop.f32.mrb[0].mxu0
    %1290 = vdwg.mxu0
    %1291 = vmatprep.subr.mxu0 0.0
    %v1292 = vand.u32 %v904, 4294901760
    %v1293 = vsub.f32 %v904, %v1292
    %v1294 = vand.u32 %v1293, 4294901760
    %1295 = vmatpush1.msra.mxu0 %v1294
    %1296 = vmatprep.subr.mxu0 0.0
    %v1297 = vand.u32 %v905, 4294901760
    %v1298 = vsub.f32 %v905, %v1297
    %v1299 = vand.u32 %v1298, 4294901760
    %1300 = vmatpush1.msra.mxu0 %v1299
    %1301 = vmatprep.subr.mxu0 0.0
    %v1302 = vand.u32 %v906, 4294901760
    %v1303 = vsub.f32 %v906, %v1302
    %v1304 = vand.u32 %v1303, 4294901760
    %1305 = vmatpush1.msra.mxu0 %v1304
    %1306 = vmatprep.subr.mxu0 0.0
    %v1307 = vand.u32 %v931, 4294901760
    %v1308 = vsub.f32 %v931, %v1307
    %v1309 = vand.u32 %v1308, 4294901760
    %1310 = vmatpush1.msra.mxu0 %v1309
    %1311 = vmatprep.subr.mxu0 0.0
    %1312 = vmatpush1.msra.mxu0 0.0
    %1313 = vmatprep.subr.mxu0 0.0
    %1314 = vmatpush1.msra.mxu0 0.0
    %1315 = vmatprep.subr.mxu0 0.0
    %1316 = vmatpush1.msra.mxu0 0.0
    %1317 = vmatprep.subr.mxu0 0.0
    %1318 = vmatpush1.msra.mxu0 0.0
    %1319 = vmatprep.subr.mxu0 0.0
    %1320 = vmatpush1.msra.mxu0 0.0
    %1321 = vmatprep.subr.mxu0 0.0
    %1322 = vmatpush1.msra.mxu0 0.0
    %1323 = vmatprep.subr.mxu0 0.0
    %1324 = vmatpush1.msra.mxu0 0.0
    %1325 = vmatprep.subr.mxu0 0.0
    %1326 = vmatpush1.msra.mxu0 0.0
    %1327 = vmatprep.subr.mxu0 0.0
    %1328 = vmatpush1.msra.mxu0 0.0
    %1329 = vmatprep.subr.mxu0 0.0
    %1330 = vmatpush1.msra.mxu0 0.0
    %1331 = vmatprep.subr.mxu0 0.0
    %1332 = vmatpush1.msra.mxu0 0.0
    %1333 = vmatprep.subr.mxu0 0.0
    %1334 = vmatpush1.msra.mxu0 0.0
    %1335 = vmatprep.subr.mxu0 0.0
    %1336 = vmatpush1.msra.mxu0 0.0
    %1337 = vmatprep.subr.mxu0 0.0
    %1338 = vmatpush1.msra.mxu0 0.0
    %1339 = vmatprep.subr.mxu0 0.0
    %1340 = vmatpush1.msra.mxu0 0.0
    %1341 = vmatprep.subr.mxu0 0.0
    %1342 = vmatpush1.msra.mxu0 0.0
    %1343 = vmatprep.subr.mxu0 0.0
    %1344 = vmatpush1.msra.mxu0 0.0
    %1345 = vmatprep.subr.mxu0 0.0
    %1346 = vmatpush1.msra.mxu0 0.0
    %1347 = vmatprep.subr.mxu0 0.0
    %1348 = vmatpush1.msra.mxu0 0.0
    %1349 = vmatprep.subr.mxu0 0.0
    %1350 = vmatpush1.msra.mxu0 0.0
    %1351 = vmatprep.subr.mxu0 0.0
    %1352 = vmatpush1.msra.mxu0 0.0
    %1353 = vmatprep.subr.mxu0 0.0
    %1354 = vmatpush1.msra.mxu0 0.0
    %1355 = vmatprep.subr.mxu0 0.0
    %1356 = vmatpush1.msra.mxu0 0.0
    %1357 = vmatprep.subr.mxu0 0.0
    %1358 = vmatpush1.msra.mxu0 0.0
    %1359 = vmatprep.subr.mxu0 0.0
    %1360 = vmatpush1.msra.mxu0 0.0
    %1361 = vmatprep.subr.mxu0 0.0
    %1362 = vmatpush1.msra.mxu0 0.0
    %1363 = vmatprep.subr.mxu0 0.0
    %1364 = vmatpush1.msra.mxu0 0.0
    %1365 = vmatprep.subr.mxu0 0.0
    %1366 = vmatpush1.msra.mxu0 0.0
    %1367 = vmatprep.mubr.f32.mxu0 0.0
    %v1368 = vand.u32 %v924, 4294901760
    %1369 = vmatmul.mubr.f32.gmra.mrb[0].mxu0 %v1368
    %v1370 = vpop.f32.mrb[0].mxu0
    %v1371 = vadd.f32 %v1280, %v1370
    %v1372 = vpop.f32.mrb[0].mxu0
    %1373 = vmatprep.mubr.f32.mxu0 0.0
    %v1374 = vand.u32 %v927, 4294901760
    %1375 = vmatmul.mubr.f32.gmra.mrb[0].mxu0 %v1374
    %v1376 = vpop.f32.mrb[0].mxu0
    %v1377 = vadd.f32 %v1288, %v1376
    %v1378 = vpop.f32.mrb[0].mxu0
    %1379 = vdwg.mxu0
    %1380 = vmatprep.subr.mxu0 0.0
    %v1381 = vand.u32 %v904, 4294901760
    %1382 = vmatpush1.msra.mxu0 %v1381
    %1383 = vmatprep.subr.mxu0 0.0
    %v1384 = vand.u32 %v905, 4294901760
    %1385 = vmatpush1.msra.mxu0 %v1384
    %1386 = vmatprep.subr.mxu0 0.0
    %v1387 = vand.u32 %v906, 4294901760
    %1388 = vmatpush1.msra.mxu0 %v1387
    %1389 = vmatprep.subr.mxu0 0.0
    %v1390 = vand.u32 %v931, 4294901760
    %1391 = vmatpush1.msra.mxu0 %v1390
    %1392 = vmatprep.subr.mxu0 0.0
    %1393 = vmatpush1.msra.mxu0 0.0
    %1394 = vmatprep.subr.mxu0 0.0
    %1395 = vmatpush1.msra.mxu0 0.0
    %1396 = vmatprep.subr.mxu0 0.0
    %1397 = vmatpush1.msra.mxu0 0.0
    %1398 = vmatprep.subr.mxu0 0.0
    %1399 = vmatpush1.msra.mxu0 0.0
    %1400 = vmatprep.subr.mxu0 0.0
    %1401 = vmatpush1.msra.mxu0 0.0
    %1402 = vmatprep.subr.mxu0 0.0
    %1403 = vmatpush1.msra.mxu0 0.0
    %1404 = vmatprep.subr.mxu0 0.0
    %1405 = vmatpush1.msra.mxu0 0.0
    %1406 = vmatprep.subr.mxu0 0.0
    %1407 = vmatpush1.msra.mxu0 0.0
    %1408 = vmatprep.subr.mxu0 0.0
    %1409 = vmatpush1.msra.mxu0 0.0
    %1410 = vmatprep.subr.mxu0 0.0
    %1411 = vmatpush1.msra.mxu0 0.0
    %1412 = vmatprep.subr.mxu0 0.0
    %1413 = vmatpush1.msra.mxu0 0.0
    %1414 = vmatprep.subr.mxu0 0.0
    %1415 = vmatpush1.msra.mxu0 0.0
    %1416 = vmatprep.subr.mxu0 0.0
    %1417 = vmatpush1.msra.mxu0 0.0
    %1418 = vmatprep.subr.mxu0 0.0
    %1419 = vmatpush1.msra.mxu0 0.0
    %1420 = vmatprep.subr.mxu0 0.0
    %1421 = vmatpush1.msra.mxu0 0.0
    %1422 = vmatprep.subr.mxu0 0.0
    %1423 = vmatpush1.msra.mxu0 0.0
    %1424 = vmatprep.subr.mxu0 0.0
    %1425 = vmatpush1.msra.mxu0 0.0
    %1426 = vmatprep.subr.mxu0 0.0
    %1427 = vmatpush1.msra.mxu0 0.0
    %1428 = vmatprep.subr.mxu0 0.0
    %1429 = vmatpush1.msra.mxu0 0.0
    %1430 = vmatprep.subr.mxu0 0.0
    %1431 = vmatpush1.msra.mxu0 0.0
    %1432 = vmatprep.subr.mxu0 0.0
    %1433 = vmatpush1.msra.mxu0 0.0
    %1434 = vmatprep.subr.mxu0 0.0
    %1435 = vmatpush1.msra.mxu0 0.0
    %1436 = vmatprep.subr.mxu0 0.0
    %1437 = vmatpush1.msra.mxu0 0.0
    %1438 = vmatprep.subr.mxu0 0.0
    %1439 = vmatpush1.msra.mxu0 0.0
    %1440 = vmatprep.subr.mxu0 0.0
    %1441 = vmatpush1.msra.mxu0 0.0
    %1442 = vmatprep.subr.mxu0 0.0
    %1443 = vmatpush1.msra.mxu0 0.0
    %1444 = vmatprep.subr.mxu0 0.0
    %1445 = vmatpush1.msra.mxu0 0.0
    %1446 = vmatprep.subr.mxu0 0.0
    %1447 = vmatpush1.msra.mxu0 0.0
    %1448 = vmatprep.mubr.f32.mxu0 0.0
    %v1449 = vand.u32 %v924, 4294901760
    %1450 = vmatmul.mubr.f32.gmra.mrb[0].mxu0 %v1449
    %v1451 = vpop.f32.mrb[0].mxu0
    %v1452 = vadd.f32 %v1371, %v1451
    %v1453 = vpop.f32.mrb[0].mxu0
    %1454 = vmatprep.mubr.f32.mxu0 0.0
    %v1455 = vand.u32 %v927, 4294901760
    %1456 = vmatmul.mubr.f32.gmra.mrb[0].mxu0 %v1455
    %v1457 = vpop.f32.mrb[0].mxu0
    %v1458 = vadd.f32 %v1377, %v1457
    %v1459 = vpop.f32.mrb[0].mxu0
    %1460 = vdwg.mxu0
    %v1461 = vxor.u32 %v1452, 2147483648
    %v1462 = vxor.u32 %v1458, 2147483648
    %v1463 = vmul.f32 %v1461, 1.442695
    %v1464 = vpow.pop %v1463
    %v1465 = vmul.f32 %v1462, 1.442695
    %v1466 = vpow.pop %v1465
    %v1467 = vadd.f32 %v1464, 1.0
    %v1468 = vadd.f32 %v1466, 1.0
    %v1469 = vrcp.pop %v1467
    %v1470 = vmul.f32 1.0, %v1469
    %v1471 = vrcp.pop %v1468
    %v1472 = vmul.f32 1.0, %v1471
    %v1473 = vld [vmem:[%s5] sm:$0x1]
    %v1474 = vld [vmem:[#allocation2] sm:$0x1]
    %1476 = vset.pattern.permute.xlu0 0
    %1477 = vperm.xlu0 %1476, %v1474
    %v1478 = vpop.permute.xlu0 %1477
    %v1480 = vlaneseq
    %v1481 = vshrl.u32 %v1480, 7
    %v1482 = vsub.s32 0, %v1481
    %v1483 = vrot.slane %v1478, %v1482
    %v1485 = vsel %vm73, %v1473, 0
    %vm1487 = vcmask 1044480
    %v1489 = vsel %vm1487, %v1472, 0
    %1491 = vmatprep.subr.mxu0 0.0
    %v1492 = vand.u32 %v1470, 4294901760
    %1493 = vmatpush1.msra.mxu0 %v1492
    %1494 = vmatprep.subr.mxu0 0.0
    %v1495 = vand.u32 %v1489, 4294901760
    %1496 = vmatpush1.msra.mxu0 %v1495
    %1497 = vmatprep.subr.mxu0 0.0
    %1498 = vmatpush1.msra.mxu0 0.0
    %1499 = vmatprep.subr.mxu0 0.0
    %1500 = vmatpush1.msra.mxu0 0.0
    %1501 = vmatprep.subr.mxu0 0.0
    %1502 = vmatpush1.msra.mxu0 0.0
    %1503 = vmatprep.subr.mxu0 0.0
    %1504 = vmatpush1.msra.mxu0 0.0
    %1505 = vmatprep.subr.mxu0 0.0
    %1506 = vmatpush1.msra.mxu0 0.0
    %1507 = vmatprep.subr.mxu0 0.0
    %1508 = vmatpush1.msra.mxu0 0.0
    %1509 = vmatprep.subr.mxu0 0.0
    %1510 = vmatpush1.msra.mxu0 0.0
    %1511 = vmatprep.subr.mxu0 0.0
    %1512 = vmatpush1.msra.mxu0 0.0
    %1513 = vmatprep.subr.mxu0 0.0
    %1514 = vmatpush1.msra.mxu0 0.0
    %1515 = vmatprep.subr.mxu0 0.0
    %1516 = vmatpush1.msra.mxu0 0.0
    %1517 = vmatprep.subr.mxu0 0.0
    %1518 = vmatpush1.msra.mxu0 0.0
    %1519 = vmatprep.subr.mxu0 0.0
    %1520 = vmatpush1.msra.mxu0 0.0
    %1521 = vmatprep.subr.mxu0 0.0
    %1522 = vmatpush1.msra.mxu0 0.0
    %1523 = vmatprep.subr.mxu0 0.0
    %1524 = vmatpush1.msra.mxu0 0.0
    %1525 = vmatprep.subr.mxu0 0.0
    %1526 = vmatpush1.msra.mxu0 0.0
    %1527 = vmatprep.subr.mxu0 0.0
    %1528 = vmatpush1.msra.mxu0 0.0
    %1529 = vmatprep.subr.mxu0 0.0
    %1530 = vmatpush1.msra.mxu0 0.0
    %1531 = vmatprep.subr.mxu0 0.0
    %1532 = vmatpush1.msra.mxu0 0.0
    %1533 = vmatprep.subr.mxu0 0.0
    %1534 = vmatpush1.msra.mxu0 0.0
    %1535 = vmatprep.subr.mxu0 0.0
    %1536 = vmatpush1.msra.mxu0 0.0
    %1537 = vmatprep.subr.mxu0 0.0
    %1538 = vmatpush1.msra.mxu0 0.0
    %1539 = vmatprep.subr.mxu0 0.0
    %1540 = vmatpush1.msra.mxu0 0.0
    %1541 = vmatprep.subr.mxu0 0.0
    %1542 = vmatpush1.msra.mxu0 0.0
    %1543 = vmatprep.subr.mxu0 0.0
    %1544 = vmatpush1.msra.mxu0 0.0
    %1545 = vmatprep.subr.mxu0 0.0
    %1546 = vmatpush1.msra.mxu0 0.0
    %1547 = vmatprep.subr.mxu0 0.0
    %1548 = vmatpush1.msra.mxu0 0.0
    %1549 = vmatprep.subr.mxu0 0.0
    %1550 = vmatpush1.msra.mxu0 0.0
    %1551 = vmatprep.subr.mxu0 0.0
    %1552 = vmatpush1.msra.mxu0 0.0
    %1553 = vmatprep.subr.mxu0 0.0
    %1554 = vmatpush1.msra.mxu0 0.0
    %1555 = vmatprep.subr.mxu0 0.0
    %1556 = vmatpush1.msra.mxu0 0.0
    %1557 = vmatprep.mubr.f32.mxu0 0.0
    %v1558 = vand.u32 %v1485, 4294901760
    %v1559 = vsub.f32 %v1485, %v1558
    %v1560 = vand.u32 %v1559, 4294901760
    %v1561 = vsub.f32 %v1559, %v1560
    %v1562 = vand.u32 %v1561, 4294901760
    %1563 = vmatmul.mubr.f32.gmra.mrb[0].mxu0 %v1562
    %v1564 = vpop.f32.mrb[0].mxu0
    %v1565 = vadd.f32 %v1483, %v1564
    %v1566 = vpop.f32.mrb[0].mxu0
    %1567 = vdwg.mxu0
    %1568 = vmatprep.subr.mxu0 0.0
    %v1569 = vand.u32 %v1470, 4294901760
    %v1570 = vsub.f32 %v1470, %v1569
    %v1571 = vand.u32 %v1570, 4294901760
    %v1572 = vsub.f32 %v1570, %v1571
    %v1573 = vand.u32 %v1572, 4294901760
    %1574 = vmatpush1.msra.mxu0 %v1573
    %1575 = vmatprep.subr.mxu0 0.0
    %v1576 = vand.u32 %v1489, 4294901760
    %v1577 = vsub.f32 %v1489, %v1576
    %v1578 = vand.u32 %v1577, 4294901760
    %v1579 = vsub.f32 %v1577, %v1578
    %v1580 = vand.u32 %v1579, 4294901760
    %1581 = vmatpush1.msra.mxu0 %v1580
    %1582 = vmatprep.subr.mxu0 0.0
    %1583 = vmatpush1.msra.mxu0 0.0
    %1584 = vmatprep.subr.mxu0 0.0
    %1585 = vmatpush1.msra.mxu0 0.0
    %1586 = vmatprep.subr.mxu0 0.0
    %1587 = vmatpush1.msra.mxu0 0.0
    %1588 = vmatprep.subr.mxu0 0.0
    %1589 = vmatpush1.msra.mxu0 0.0
    %1590 = vmatprep.subr.mxu0 0.0
    %1591 = vmatpush1.msra.mxu0 0.0
    %1592 = vmatprep.subr.mxu0 0.0
    %1593 = vmatpush1.msra.mxu0 0.0
    %1594 = vmatprep.subr.mxu0 0.0
    %1595 = vmatpush1.msra.mxu0 0.0
    %1596 = vmatprep.subr.mxu0 0.0
    %1597 = vmatpush1.msra.mxu0 0.0
    %1598 = vmatprep.subr.mxu0 0.0
    %1599 = vmatpush1.msra.mxu0 0.0
    %1600 = vmatprep.subr.mxu0 0.0
    %1601 = vmatpush1.msra.mxu0 0.0
    %1602 = vmatprep.subr.mxu0 0.0
    %1603 = vmatpush1.msra.mxu0 0.0
    %1604 = vmatprep.subr.mxu0 0.0
    %1605 = vmatpush1.msra.mxu0 0.0
    %1606 = vmatprep.subr.mxu0 0.0
    %1607 = vmatpush1.msra.mxu0 0.0
    %1608 = vmatprep.subr.mxu0 0.0
    %1609 = vmatpush1.msra.mxu0 0.0
    %1610 = vmatprep.subr.mxu0 0.0
    %1611 = vmatpush1.msra.mxu0 0.0
    %1612 = vmatprep.subr.mxu0 0.0
    %1613 = vmatpush1.msra.mxu0 0.0
    %1614 = vmatprep.subr.mxu0 0.0
    %1615 = vmatpush1.msra.mxu0 0.0
    %1616 = vmatprep.subr.mxu0 0.0
    %1617 = vmatpush1.msra.mxu0 0.0
    %1618 = vmatprep.subr.mxu0 0.0
    %1619 = vmatpush1.msra.mxu0 0.0
    %1620 = vmatprep.subr.mxu0 0.0
    %1621 = vmatpush1.msra.mxu0 0.0
    %1622 = vmatprep.subr.mxu0 0.0
    %1623 = vmatpush1.msra.mxu0 0.0
    %1624 = vmatprep.subr.mxu0 0.0
    %1625 = vmatpush1.msra.mxu0 0.0
    %1626 = vmatprep.subr.mxu0 0.0
    %1627 = vmatpush1.msra.mxu0 0.0
    %1628 = vmatprep.subr.mxu0 0.0
    %1629 = vmatpush1.msra.mxu0 0.0
    %1630 = vmatprep.subr.mxu0 0.0
    %1631 = vmatpush1.msra.mxu0 0.0
    %1632 = vmatprep.subr.mxu0 0.0
    %1633 = vmatpush1.msra.mxu0 0.0
    %1634 = vmatprep.subr.mxu0 0.0
    %1635 = vmatpush1.msra.mxu0 0.0
    %1636 = vmatprep.subr.mxu0 0.0
    %1637 = vmatpush1.msra.mxu0 0.0
    %1638 = vmatprep.subr.mxu0 0.0
    %1639 = vmatpush1.msra.mxu0 0.0
    %1640 = vmatprep.subr.mxu0 0.0
    %1641 = vmatpush1.msra.mxu0 0.0
    %1642 = vmatprep.mubr.f32.mxu0 0.0
    %v1643 = vand.u32 %v1485, 4294901760
    %1644 = vmatmul.mubr.f32.gmra.mrb[0].mxu0 %v1643
    %v1645 = vpop.f32.mrb[0].mxu0
    %v1646 = vadd.f32 %v1565, %v1645
    %v1647 = vpop.f32.mrb[0].mxu0
    %1648 = vdwg.mxu0
    %1649 = vmatprep.subr.mxu0 0.0
    %v1650 = vand.u32 %v1470, 4294901760
    %v1651 = vsub.f32 %v1470, %v1650
    %1652 = vmatpush1.msra.mxu0 %v1651
    %1653 = vmatprep.subr.mxu0 0.0
    %v1654 = vand.u32 %v1489, 4294901760
    %v1655 = vsub.f32 %v1489, %v1654
    %1656 = vmatpush1.msra.mxu0 %v1655
    %1657 = vmatprep.subr.mxu0 0.0
    %1658 = vmatpush1.msra.mxu0 0.0
    %1659 = vmatprep.subr.mxu0 0.0
    %1660 = vmatpush1.msra.mxu0 0.0
    %1661 = vmatprep.subr.mxu0 0.0
    %1662 = vmatpush1.msra.mxu0 0.0
    %1663 = vmatprep.subr.mxu0 0.0
    %1664 = vmatpush1.msra.mxu0 0.0
    %1665 = vmatprep.subr.mxu0 0.0
    %1666 = vmatpush1.msra.mxu0 0.0
    %1667 = vmatprep.subr.mxu0 0.0
    %1668 = vmatpush1.msra.mxu0 0.0
    %1669 = vmatprep.subr.mxu0 0.0
    %1670 = vmatpush1.msra.mxu0 0.0
    %1671 = vmatprep.subr.mxu0 0.0
    %1672 = vmatpush1.msra.mxu0 0.0
    %1673 = vmatprep.subr.mxu0 0.0
    %1674 = vmatpush1.msra.mxu0 0.0
    %1675 = vmatprep.subr.mxu0 0.0
    %1676 = vmatpush1.msra.mxu0 0.0
    %1677 = vmatprep.subr.mxu0 0.0
    %1678 = vmatpush1.msra.mxu0 0.0
    %1679 = vmatprep.subr.mxu0 0.0
    %1680 = vmatpush1.msra.mxu0 0.0
    %1681 = vmatprep.subr.mxu0 0.0
    %1682 = vmatpush1.msra.mxu0 0.0
    %1683 = vmatprep.subr.mxu0 0.0
    %1684 = vmatpush1.msra.mxu0 0.0
    %1685 = vmatprep.subr.mxu0 0.0
    %1686 = vmatpush1.msra.mxu0 0.0
    %1687 = vmatprep.subr.mxu0 0.0
    %1688 = vmatpush1.msra.mxu0 0.0
    %1689 = vmatprep.subr.mxu0 0.0
    %1690 = vmatpush1.msra.mxu0 0.0
    %1691 = vmatprep.subr.mxu0 0.0
    %1692 = vmatpush1.msra.mxu0 0.0
    %1693 = vmatprep.subr.mxu0 0.0
    %1694 = vmatpush1.msra.mxu0 0.0
    %1695 = vmatprep.subr.mxu0 0.0
    %1696 = vmatpush1.msra.mxu0 0.0
    %1697 = vmatprep.subr.mxu0 0.0
    %1698 = vmatpush1.msra.mxu0 0.0
    %1699 = vmatprep.subr.mxu0 0.0
    %1700 = vmatpush1.msra.mxu0 0.0
    %1701 = vmatprep.subr.mxu0 0.0
    %1702 = vmatpush1.msra.mxu0 0.0
    %1703 = vmatprep.subr.mxu0 0.0
    %1704 = vmatpush1.msra.mxu0 0.0
    %1705 = vmatprep.subr.mxu0 0.0
    %1706 = vmatpush1.msra.mxu0 0.0
    %1707 = vmatprep.subr.mxu0 0.0
    %1708 = vmatpush1.msra.mxu0 0.0
    %1709 = vmatprep.subr.mxu0 0.0
    %1710 = vmatpush1.msra.mxu0 0.0
    %1711 = vmatprep.subr.mxu0 0.0
    %1712 = vmatpush1.msra.mxu0 0.0
    %1713 = vmatprep.subr.mxu0 0.0
    %1714 = vmatpush1.msra.mxu0 0.0
    %1715 = vmatprep.subr.mxu0 0.0
    %1716 = vmatpush1.msra.mxu0 0.0
    %1717 = vmatprep.mubr.f32.mxu0 0.0
    %v1718 = vand.u32 %v1485, 4294901760
    %v1719 = vsub.f32 %v1485, %v1718
    %1720 = vmatmul.mubr.f32.gmra.mrb[0].mxu0 %v1719
    %v1721 = vpop.f32.mrb[0].mxu0
    %v1722 = vadd.f32 %v1646, %v1721
    %v1723 = vpop.f32.mrb[0].mxu0
    %1724 = vdwg.mxu0
    %1725 = vmatprep.subr.mxu0 0.0
    %v1726 = vand.u32 %v1470, 4294901760
    %1727 = vmatpush1.msra.mxu0 %v1726
    %1728 = vmatprep.subr.mxu0 0.0
    %v1729 = vand.u32 %v1489, 4294901760
    %1730 = vmatpush1.msra.mxu0 %v1729
    %1731 = vmatprep.subr.mxu0 0.0
    %1732 = vmatpush1.msra.mxu0 0.0
    %1733 = vmatprep.subr.mxu0 0.0
    %1734 = vmatpush1.msra.mxu0 0.0
    %1735 = vmatprep.subr.mxu0 0.0
    %1736 = vmatpush1.msra.mxu0 0.0
    %1737 = vmatprep.subr.mxu0 0.0
    %1738 = vmatpush1.msra.mxu0 0.0
    %1739 = vmatprep.subr.mxu0 0.0
    %1740 = vmatpush1.msra.mxu0 0.0
    %1741 = vmatprep.subr.mxu0 0.0
    %1742 = vmatpush1.msra.mxu0 0.0
    %1743 = vmatprep.subr.mxu0 0.0
    %1744 = vmatpush1.msra.mxu0 0.0
    %1745 = vmatprep.subr.mxu0 0.0
    %1746 = vmatpush1.msra.mxu0 0.0
    %1747 = vmatprep.subr.mxu0 0.0
    %1748 = vmatpush1.msra.mxu0 0.0
    %1749 = vmatprep.subr.mxu0 0.0
    %1750 = vmatpush1.msra.mxu0 0.0
    %1751 = vmatprep.subr.mxu0 0.0
    %1752 = vmatpush1.msra.mxu0 0.0
    %1753 = vmatprep.subr.mxu0 0.0
    %1754 = vmatpush1.msra.mxu0 0.0
    %1755 = vmatprep.subr.mxu0 0.0
    %1756 = vmatpush1.msra.mxu0 0.0
    %1757 = vmatprep.subr.mxu0 0.0
    %1758 = vmatpush1.msra.mxu0 0.0
    %1759 = vmatprep.subr.mxu0 0.0
    %1760 = vmatpush1.msra.mxu0 0.0
    %1761 = vmatprep.subr.mxu0 0.0
    %1762 = vmatpush1.msra.mxu0 0.0
    %1763 = vmatprep.subr.mxu0 0.0
    %1764 = vmatpush1.msra.mxu0 0.0
    %1765 = vmatprep.subr.mxu0 0.0
    %1766 = vmatpush1.msra.mxu0 0.0
    %1767 = vmatprep.subr.mxu0 0.0
    %1768 = vmatpush1.msra.mxu0 0.0
    %1769 = vmatprep.subr.mxu0 0.0
    %1770 = vmatpush1.msra.mxu0 0.0
    %1771 = vmatprep.subr.mxu0 0.0
    %1772 = vmatpush1.msra.mxu0 0.0
    %1773 = vmatprep.subr.mxu0 0.0
    %1774 = vmatpush1.msra.mxu0 0.0
    %1775 = vmatprep.subr.mxu0 0.0
    %1776 = vmatpush1.msra.mxu0 0.0
    %1777 = vmatprep.subr.mxu0 0.0
    %1778 = vmatpush1.msra.mxu0 0.0
    %1779 = vmatprep.subr.mxu0 0.0
    %1780 = vmatpush1.msra.mxu0 0.0
    %1781 = vmatprep.subr.mxu0 0.0
    %1782 = vmatpush1.msra.mxu0 0.0
    %1783 = vmatprep.subr.mxu0 0.0
    %1784 = vmatpush1.msra.mxu0 0.0
    %1785 = vmatprep.subr.mxu0 0.0
    %1786 = vmatpush1.msra.mxu0 0.0
    %1787 = vmatprep.subr.mxu0 0.0
    %1788 = vmatpush1.msra.mxu0 0.0
    %1789 = vmatprep.subr.mxu0 0.0
    %1790 = vmatpush1.msra.mxu0 0.0
    %1791 = vmatprep.mubr.f32.mxu0 0.0
    %v1792 = vand.u32 %v1485, 4294901760
    %v1793 = vsub.f32 %v1485, %v1792
    %v1794 = vand.u32 %v1793, 4294901760
    %1795 = vmatmul.mubr.f32.gmra.mrb[0].mxu0 %v1794
    %v1796 = vpop.f32.mrb[0].mxu0
    %v1797 = vadd.f32 %v1722, %v1796
    %v1798 = vpop.f32.mrb[0].mxu0
    %1799 = vdwg.mxu0
    %1800 = vmatprep.subr.mxu0 0.0
    %v1801 = vand.u32 %v1470, 4294901760
    %v1802 = vsub.f32 %v1470, %v1801
    %v1803 = vand.u32 %v1802, 4294901760
    %1804 = vmatpush1.msra.mxu0 %v1803
    %1805 = vmatprep.subr.mxu0 0.0
    %v1806 = vand.u32 %v1489, 4294901760
    %v1807 = vsub.f32 %v1489, %v1806
    %v1808 = vand.u32 %v1807, 4294901760
    %1809 = vmatpush1.msra.mxu0 %v1808
    %1810 = vmatprep.subr.mxu0 0.0
    %1811 = vmatpush1.msra.mxu0 0.0
    %1812 = vmatprep.subr.mxu0 0.0
    %1813 = vmatpush1.msra.mxu0 0.0
    %1814 = vmatprep.subr.mxu0 0.0
    %1815 = vmatpush1.msra.mxu0 0.0
    %1816 = vmatprep.subr.mxu0 0.0
    %1817 = vmatpush1.msra.mxu0 0.0
    %1818 = vmatprep.subr.mxu0 0.0
    %1819 = vmatpush1.msra.mxu0 0.0
    %1820 = vmatprep.subr.mxu0 0.0
    %1821 = vmatpush1.msra.mxu0 0.0
    %1822 = vmatprep.subr.mxu0 0.0
    %1823 = vmatpush1.msra.mxu0 0.0
    %1824 = vmatprep.subr.mxu0 0.0
    %1825 = vmatpush1.msra.mxu0 0.0
    %1826 = vmatprep.subr.mxu0 0.0
    %1827 = vmatpush1.msra.mxu0 0.0
    %1828 = vmatprep.subr.mxu0 0.0
    %1829 = vmatpush1.msra.mxu0 0.0
    %1830 = vmatprep.subr.mxu0 0.0
    %1831 = vmatpush1.msra.mxu0 0.0
    %1832 = vmatprep.subr.mxu0 0.0
    %1833 = vmatpush1.msra.mxu0 0.0
    %1834 = vmatprep.subr.mxu0 0.0
    %1835 = vmatpush1.msra.mxu0 0.0
    %1836 = vmatprep.subr.mxu0 0.0
    %1837 = vmatpush1.msra.mxu0 0.0
    %1838 = vmatprep.subr.mxu0 0.0
    %1839 = vmatpush1.msra.mxu0 0.0
    %1840 = vmatprep.subr.mxu0 0.0
    %1841 = vmatpush1.msra.mxu0 0.0
    %1842 = vmatprep.subr.mxu0 0.0
    %1843 = vmatpush1.msra.mxu0 0.0
    %1844 = vmatprep.subr.mxu0 0.0
    %1845 = vmatpush1.msra.mxu0 0.0
    %1846 = vmatprep.subr.mxu0 0.0
    %1847 = vmatpush1.msra.mxu0 0.0
    %1848 = vmatprep.subr.mxu0 0.0
    %1849 = vmatpush1.msra.mxu0 0.0
    %1850 = vmatprep.subr.mxu0 0.0
    %1851 = vmatpush1.msra.mxu0 0.0
    %1852 = vmatprep.subr.mxu0 0.0
    %1853 = vmatpush1.msra.mxu0 0.0
    %1854 = vmatprep.subr.mxu0 0.0
    %1855 = vmatpush1.msra.mxu0 0.0
    %1856 = vmatprep.subr.mxu0 0.0
    %1857 = vmatpush1.msra.mxu0 0.0
    %1858 = vmatprep.subr.mxu0 0.0
    %1859 = vmatpush1.msra.mxu0 0.0
    %1860 = vmatprep.subr.mxu0 0.0
    %1861 = vmatpush1.msra.mxu0 0.0
    %1862 = vmatprep.subr.mxu0 0.0
    %1863 = vmatpush1.msra.mxu0 0.0
    %1864 = vmatprep.subr.mxu0 0.0
    %1865 = vmatpush1.msra.mxu0 0.0
    %1866 = vmatprep.subr.mxu0 0.0
    %1867 = vmatpush1.msra.mxu0 0.0
    %1868 = vmatprep.subr.mxu0 0.0
    %1869 = vmatpush1.msra.mxu0 0.0
    %1870 = vmatprep.mubr.f32.mxu0 0.0
    %v1871 = vand.u32 %v1485, 4294901760
    %1872 = vmatmul.mubr.f32.gmra.mrb[0].mxu0 %v1871
    %v1873 = vpop.f32.mrb[0].mxu0
    %v1874 = vadd.f32 %v1797, %v1873
    %v1875 = vpop.f32.mrb[0].mxu0
    %1876 = vdwg.mxu0
    %1877 = vmatprep.subr.mxu0 0.0
    %v1878 = vand.u32 %v1470, 4294901760
    %1879 = vmatpush1.msra.mxu0 %v1878
    %1880 = vmatprep.subr.mxu0 0.0
    %v1881 = vand.u32 %v1489, 4294901760
    %1882 = vmatpush1.msra.mxu0 %v1881
    %1883 = vmatprep.subr.mxu0 0.0
    %1884 = vmatpush1.msra.mxu0 0.0
    %1885 = vmatprep.subr.mxu0 0.0
    %1886 = vmatpush1.msra.mxu0 0.0
    %1887 = vmatprep.subr.mxu0 0.0
    %1888 = vmatpush1.msra.mxu0 0.0
    %1889 = vmatprep.subr.mxu0 0.0
    %1890 = vmatpush1.msra.mxu0 0.0
    %1891 = vmatprep.subr.mxu0 0.0
    %1892 = vmatpush1.msra.mxu0 0.0
    %1893 = vmatprep.subr.mxu0 0.0
    %1894 = vmatpush1.msra.mxu0 0.0
    %1895 = vmatprep.subr.mxu0 0.0
    %1896 = vmatpush1.msra.mxu0 0.0
    %1897 = vmatprep.subr.mxu0 0.0
    %1898 = vmatpush1.msra.mxu0 0.0
    %1899 = vmatprep.subr.mxu0 0.0
    %1900 = vmatpush1.msra.mxu0 0.0
    %1901 = vmatprep.subr.mxu0 0.0
    %1902 = vmatpush1.msra.mxu0 0.0
    %1903 = vmatprep.subr.mxu0 0.0
    %1904 = vmatpush1.msra.mxu0 0.0
    %1905 = vmatprep.subr.mxu0 0.0
    %1906 = vmatpush1.msra.mxu0 0.0
    %1907 = vmatprep.subr.mxu0 0.0
    %1908 = vmatpush1.msra.mxu0 0.0
    %1909 = vmatprep.subr.mxu0 0.0
    %1910 = vmatpush1.msra.mxu0 0.0
    %1911 = vmatprep.subr.mxu0 0.0
    %1912 = vmatpush1.msra.mxu0 0.0
    %1913 = vmatprep.subr.mxu0 0.0
    %1914 = vmatpush1.msra.mxu0 0.0
    %1915 = vmatprep.subr.mxu0 0.0
    %1916 = vmatpush1.msra.mxu0 0.0
    %1917 = vmatprep.subr.mxu0 0.0
    %1918 = vmatpush1.msra.mxu0 0.0
    %1919 = vmatprep.subr.mxu0 0.0
    %1920 = vmatpush1.msra.mxu0 0.0
    %1921 = vmatprep.subr.mxu0 0.0
    %1922 = vmatpush1.msra.mxu0 0.0
    %1923 = vmatprep.subr.mxu0 0.0
    %1924 = vmatpush1.msra.mxu0 0.0
    %1925 = vmatprep.subr.mxu0 0.0
    %1926 = vmatpush1.msra.mxu0 0.0
    %1927 = vmatprep.subr.mxu0 0.0
    %1928 = vmatpush1.msra.mxu0 0.0
    %1929 = vmatprep.subr.mxu0 0.0
    %1930 = vmatpush1.msra.mxu0 0.0
    %1931 = vmatprep.subr.mxu0 0.0
    %1932 = vmatpush1.msra.mxu0 0.0
    %1933 = vmatprep.subr.mxu0 0.0
    %1934 = vmatpush1.msra.mxu0 0.0
    %1935 = vmatprep.subr.mxu0 0.0
    %1936 = vmatpush1.msra.mxu0 0.0
    %1937 = vmatprep.subr.mxu0 0.0
    %1938 = vmatpush1.msra.mxu0 0.0
    %1939 = vmatprep.subr.mxu0 0.0
    %1940 = vmatpush1.msra.mxu0 0.0
    %1941 = vmatprep.subr.mxu0 0.0
    %1942 = vmatpush1.msra.mxu0 0.0
    %1943 = vmatprep.mubr.f32.mxu0 0.0
    %v1944 = vand.u32 %v1485, 4294901760
    %1945 = vmatmul.mubr.f32.gmra.mrb[0].mxu0 %v1944
    %v1946 = vpop.f32.mrb[0].mxu0
    %v1947 = vadd.f32 %v1874, %v1946
    %v1948 = vpop.f32.mrb[0].mxu0
    %1949 = vdwg.mxu0
    %v1950 = vmax.f32 %v1947, 0.0
    %1951 = vst [vmem:[#allocation3] sm:$0x1] %v1950
    // Predicated region
    $region30: #{net_forward.1} parent=1 // pred_check
      _
    $region31: #{net_forward.1} parent=1 // pred_check_branch
      %1953 = sbr.rel (0) target = $region33
    $region32: #{net_forward.1} parent=1 // pred_region
      %s1955 = ssub.s32 16, 16
      %1956 = vsyncadd [#allocation4], %s1955
      %s1958 = sshll.u32 [#allocation3], 4
      %s1959 = int_to_ptr.vmem [resolvable:$true] %s1958
      %1961 = dma.vmem_to_hbm [thread:$0]  %s1959, 16, %s7, [#allocation4]
    $region33: #{net_forward.1} parent=1 // pred_fallthru
      _
    // Predicated region
    $region34: #{net_forward.1} parent=1 // pred_check
      _
    $region35: #{net_forward.1} parent=1 // pred_check_branch
      %1963 = sbr.rel (0) target = $region37
    $region36: #{net_forward.1} parent=1 // pred_region
      %1964 = dma.done [#allocation4], 16
    $region37: #{net_forward.1} parent=1 // pred_fallthru
      _
    %1965 = vsyncpa [#allocation4], 1

</llo_original>
